<compile_context>
chip_gen: v6e
topology: v6e:2x2x1
jax: 0.10.0
libtpu: 0.0.40
codegen_flags: <defaults>
</compile_context>

<pallas_src>
import functools
import math

import jax
import jax.numpy as jnp
from jax.experimental import pallas as pl
from jax.experimental.pallas import tpu as pltpu


# ---------------------------------------------------------------------------
# Kernel: 3x3 "same" conv + bias + ReLU + PixelShuffle(r) for one (batch, H-tile).
# ---------------------------------------------------------------------------
def _conv3x3_relu_ps_kernel(x_ref, top_ref, bot_ref, w_ref, b_ref, o_ref, *, r, im2col):
    # x_ref:   (1, TH, W, Cin)      current H-tile (unpadded)
    # top_ref: (1, 1,  W, Cin)      row above the tile (zeros at the image edge)
    # bot_ref: (1, 1,  W, Cin)      row below the tile (zeros at the image edge)
    # w_ref:   (9*Cin, Cout)  if im2col else (3, 3*Cin, Cout)
    #          (out channels already in (i, j, c)-major pixel-shuffle order)
    # b_ref:   (1, Cout)            f32 bias (same channel permutation)
    # o_ref:   (1, TH, r, W, r*C)   fused pixel-shuffled output tile
    TH, W, Cin = x_ref.shape[1], x_ref.shape[2], x_ref.shape[3]
    Cout = w_ref.shape[-1]
    C = Cout // (r * r)
    HW = TH * W
    S = (TH + 2) * W
    dt = x_ref.dtype

    # Single staging copy: vertically haloed tile, rows flattened onto sublanes.
    mid = jnp.concatenate([top_ref[0], x_ref[0], bot_ref[0]], axis=0).reshape(S, Cin)

    # Image-edge masks: tiny (S, 1) 0/1 masks in the compute dtype, broadcast
    # multiply instead of a wide int32 iota + select.
    idx = jax.lax.broadcasted_iota(jnp.int32, (S, 1), 0)
    col = idx % W
    lmask = (col != 0).astype(dt)          # zero where x[.., w-1, :] is off-image
    rmask = (col != W - 1).astype(dt)      # zero where x[.., w+1, :] is off-image

    # Horizontal neighbours via XLU rolls (wrap-around rows are masked to zero).
    left = pltpu.roll(mid, shift=1, axis=0) * lmask       # x[.., w-1, :]
    right = pltpu.roll(mid, shift=S - 1, axis=0) * rmask  # x[.., w+1, :]

    if im2col:
        # Full im2col: one MXU contraction with K = 9*Cin.
        pieces = []
        for dh in range(3):                       # (dh, dw, cin)-major lane order
            for arr in (left, mid, right):        # dw = 0, 1, 2
                pieces.append(arr[dh * W: dh * W + HW, :])
        lhs = jnp.concatenate(pieces, axis=-1)    # (HW, 9*Cin)
        acc = jnp.dot(lhs, w_ref[...], preferred_element_type=jnp.float32)
    else:
        # Fold horizontal taps into the contraction: 3 dots with K = 3*Cin.
        xcat = jnp.concatenate([left, mid, right], axis=-1)   # (S, 3*Cin)
        acc = None
        for dh in range(3):
            p = jnp.dot(xcat[dh * W: dh * W + HW, :], w_ref[dh],
                        preferred_element_type=jnp.float32)
            acc = p if acc is None else acc + p

    y = jnp.maximum(acc + b_ref[...], 0.0).astype(o_ref.dtype)   # bias + ReLU (f32 acc)
    y = y.reshape(TH, W, Cout)

    # Fused PixelShuffle: with (i, j, c)-major channels, each row-parity i of the
    # upscaled image is a contiguous channel slice -> pure output addressing.
    rc = r * C
    for i in range(r):
        o_ref[0, :, i, :, :] = y[:, :, i * rc:(i + 1) * rc]


# ---------------------------------------------------------------------------
# Tiling / VMEM heuristics.
# ---------------------------------------------------------------------------
def _lanes(c):
    return ((c + 127) // 128) * 128


def _vmem_budget_and_limit():
    try:
        cap = int(pltpu.get_tpu_info().vmem_capacity_bytes)
    except Exception:
        cap = 64 * 1024 * 1024
    # ~cap/2 working-set budget (accurate estimator below), limit = 3/4 of cap
    # (=> 48 MiB on v7x's 64 MiB, 96 MiB on v5e/v6e's 128 MiB).
    budget = max(cap // 2, 8 * 1024 * 1024)
    limit = max(min((cap * 3) // 4, 96 * 1024 * 1024), 24 * 1024 * 1024)
    return budget, int(limit)


def _stage_vmem_bytes(th, W, Cin, Cout, r, isz, im2col):
    """Approximate live VMEM for one grid step (double-buffered blocks + work set)."""
    C = Cout // (r * r)
    S = (th + 2) * W
    HW = th * W
    lin, lout = _lanes(Cin), _lanes(Cout)
    in_blk = 2 * (th + 2) * W * lin * isz                 # x + halo rows, double buffered
    out_blk = 2 * th * r * W * _lanes(r * C) * isz        # fused-shuffle output, dbl buf
    wts = 2 * (9 * Cin * lout * isz + lout * 4)           # weights + bias, dbl buf
    work = 3 * S * lin * isz                              # haloed tile + 2 rolled copies
    if im2col:
        work += HW * _lanes(9 * Cin) * isz                # im2col LHS
    else:
        work += S * _lanes(3 * Cin) * isz                 # folded-K LHS
    acc = HW * lout * 4                                   # f32 accumulator
    epi = HW * lout * isz                                 # cast epilogue before stores
    return in_blk + out_blk + wts + work + acc + epi


def _choose_tile_h(N, H, W, Cin, Cout, r, isz, im2col, budget, cap_th=None):
    divs = [d for d in range(1, H + 1) if H % d == 0]
    if cap_th is not None:
        capped = [d for d in divs if d <= cap_th]
        if capped:
            divs = capped
    fits = [d for d in divs
            if _stage_vmem_bytes(d, W, Cin, Cout, r, isz, im2col) <= budget]
    if not fits:
        fits = [1]
    # v7x has 2 TensorCores sharded over the parallel grid: keep >= 2 grid steps
    # when the batch alone cannot provide them.
    if N < 2:
        multi = [d for d in fits if H // d >= 2]
        if multi:
            fits = multi
    return max(fits)


def _default_compute_dtype():
    # v5e: no f32 MXU path and bf16 halves HBM/VMEM traffic -> default bf16 there.
    try:
        kind = jax.devices()[0].device_kind.lower()
    except Exception:
        return None
    if "v5 lite" in kind or "v5e" in kind or "v5lite" in kind:
        return jnp.bfloat16
    return None


# ---------------------------------------------------------------------------
# One stage wrapper (NHWC in / NHWC out).
# ---------------------------------------------------------------------------
def conv3x3_relu_pixelshuffle(x_nhwc, w_hwio, bias, r, tile_h=None):
    N, H, W, Cin = x_nhwc.shape
    Cout = w_hwio.shape[-1]
    C = Cout // (r * r)
    dtype = x_nhwc.dtype
    isz = jnp.dtype(dtype).itemsize
    im2col = (9 * Cin) <= 256        # single K=9*Cin dot fits one MXU pass (v6e/v7x)

    budget, vmem_limit = _vmem_budget_and_limit()
    if (tile_h is not None and H % tile_h == 0
            and _stage_vmem_bytes(tile_h, W, Cin, Cout, r, isz, im2col) <= budget):
        TH = tile_h                  # user tile validated against the VMEM budget
    else:
        TH = _choose_tile_h(N, H, W, Cin, Cout, r, isz, im2col, budget, cap_th=tile_h)
    HT = H // TH

    # Permute conv output channels to (i, j, c)-major order so the pixel shuffle
    # becomes pure output addressing inside the kernel: k' = (i*r + j)*C + c.
    k = jnp.arange(Cout)
    perm = (k % C) * (r * r) + (k // C)
    w_p = w_hwio[..., perm].astype(dtype)                 # (3, 3, Cin, Cout)
    if im2col:
        w_k = w_p.reshape(9 * Cin, Cout)                  # (dh, dw, cin)-major K
        w_spec = pl.BlockSpec((9 * Cin, Cout), lambda n, t: (0, 0))
    else:
        w_k = w_p.reshape(3, 3 * Cin, Cout)               # per-dh, (dw, cin)-major K
        w_spec = pl.BlockSpec((3, 3 * Cin, Cout), lambda n, t: (0, 0, 0))
    b_p = bias[perm].astype(jnp.float32).reshape(1, Cout)

    # Halo rows: ~1/TH of an extra input pass instead of padding the whole image.
    zrow = jnp.zeros((N, 1, W, Cin), dtype)
    if HT > 1:
        x_top = jnp.concatenate([zrow, x_nhwc[:, TH - 1:H - 1:TH]], axis=1)
        x_bot = jnp.concatenate([x_nhwc[:, TH:H:TH], zrow], axis=1)
    else:
        x_top = zrow
        x_bot = zrow

    kernel = functools.partial(_conv3x3_relu_ps_kernel, r=r, im2col=im2col)
    out = pl.pallas_call(
        kernel,
        out_shape=jax.ShapeDtypeStruct((N, H, r, W, r * C), dtype),
        grid_spec=pltpu.PrefetchScalarGridSpec(
            num_scalar_prefetch=0,
            grid=(N, HT),
            in_specs=[
                pl.BlockSpec((1, TH, W, Cin), lambda n, t: (n, t, 0, 0)),
                pl.BlockSpec((1, 1, W, Cin), lambda n, t: (n, t, 0, 0)),
                pl.BlockSpec((1, 1, W, Cin), lambda n, t: (n, t, 0, 0)),
                w_spec,
                pl.BlockSpec((1, Cout), lambda n, t: (0, 0)),
            ],
            out_specs=pl.BlockSpec((1, TH, r, W, r * C),
                                   lambda n, t: (n, t, 0, 0, 0)),
        ),
        compiler_params=pltpu.CompilerParams(
            dimension_semantics=("parallel", "parallel"),
            vmem_limit_bytes=vmem_limit),
        cost_estimate=pl.CostEstimate(
            flops=int(2 * 9 * Cin * Cout) * N * H * W,
            transcendentals=0,
            bytes_accessed=int(N * H * W * (Cin + Cout) * isz)),
    )(x_nhwc, x_top, x_bot, w_k, b_p)

    # Layout-preserving (free) reshape: (N, H, r, W, r*C) -> (N, H*r, W*r, C) NHWC.
    return out.reshape(N, H * r, W * r, C)


# ---------------------------------------------------------------------------
# Full module forward (NCHW in / NCHW out, PyTorch convention).
# ---------------------------------------------------------------------------
def upsample_block_forward(x_nchw, params, scale, *, compute_dtype=None, tile_h=None):
    if scale in (2, 4, 8):
        n_stages, r = int(round(math.log2(scale))), 2
    elif scale == 3:
        n_stages, r = 1, 3
    else:
        raise ValueError("unsupported scale")
    orig_dtype = x_nchw.dtype
    x = jnp.transpose(x_nchw, (0, 2, 3, 1))              # NCHW -> NHWC (boundary only)
    cd = compute_dtype if compute_dtype is not None else _default_compute_dtype()
    if cd is not None:
        x = x.astype(cd)
    for s in range(n_stages):
        w_hwio, bias = params[s]
        x = conv3x3_relu_pixelshuffle(x, w_hwio, bias, r, tile_h=tile_h)
    return jnp.transpose(x, (0, 3, 1, 2)).astype(orig_dtype)   # NHWC -> NCHW


upsample_block_forward_jit = jax.jit(
    upsample_block_forward, static_argnames=("scale", "compute_dtype", "tile_h"))


# ---------------------------------------------------------------------------
# Parameter init (matches nn.Conv2d default init shapes; stored as HWIO).
# ---------------------------------------------------------------------------
def init_params(key, n_channels, scale):
    if scale in (2, 4, 8):
        n_stages, mult = int(round(math.log2(scale))), 4
    else:
        n_stages, mult = 1, 9
    params = []
    fan_in = n_channels * 3 * 3
    bound = 1.0 / math.sqrt(fan_in)
    for _ in range(n_stages):
        key, k1, k2 = jax.random.split(key, 3)
        cout = mult * n_channels
        w_oihw = jax.random.uniform(k1, (cout, n_channels, 3, 3),
                                    jnp.float32, -bound, bound)
        bias = jax.random.uniform(k2, (cout,), jnp.float32, -bound, bound)
        params.append((jnp.transpose(w_oihw, (2, 3, 1, 0)), bias))   # OIHW -> HWIO
    return params


# ---------------------------------------------------------------------------
# Pure-JAX reference (lax conv + NCHW pixel shuffle) for verification.
# ---------------------------------------------------------------------------
def _reference_forward(x_nchw, params, scale):
    if scale in (2, 4, 8):
        n_stages, r = int(round(math.log2(scale))), 2
    else:
        n_stages, r = 1, 3
    out = x_nchw
    for s in range(n_stages):
        w_hwio, bias = params[s]
        w_oihw = jnp.transpose(w_hwio, (3, 2, 0, 1))
        out = jax.lax.conv_general_dilated(
            out, w_oihw, (1, 1), "SAME",
            dimension_numbers=("NCHW", "OIHW", "NCHW"))
        out = jnp.maximum(out + bias[None, :, None, None], 0.0)
        N, K, H, W = out.shape
        C = K // (r * r)
        out = out.reshape(N, C, r, r, H, W)
        out = jnp.transpose(out, (0, 1, 4, 2, 5, 3))
        out = out.reshape(N, C, H * r, W * r)
    return out


if __name__ == "__main__":
    n_channels = 4
    N, H, W = 2, 16, 16

    key = jax.random.PRNGKey(0)
    key, kx = jax.random.split(key)
    x = jax.random.normal(kx, (N, n_channels, H, W), jnp.float32)

    # scale=2: one fused conv+ReLU+PixelShuffle stage, H tiled into 2 halo'd row blocks.
    params2 = init_params(key, n_channels, 2)
    out2 = jax.block_until_ready(
        upsample_block_forward_jit(x, params2, scale=2,
                                   compute_dtype=jnp.float32, tile_h=8))
    assert out2.shape == (N, n_channels, 2 * H, 2 * W), out2.shape
    ref2 = _reference_forward(x, params2, 2)
    assert jnp.allclose(out2, ref2, atol=1e-4, rtol=1e-4), "scale=2 mismatch"

    # scale=4: two chained stages, intermediates stay NHWC (no per-stage NCHW round trip).
    params4 = init_params(key, n_channels, 4)
    out4 = jax.block_until_ready(
        upsample_block_forward_jit(x, params4, scale=4,
                                   compute_dtype=jnp.float32, tile_h=8))
    assert out4.shape == (N, n_channels, 4 * H, 4 * W), out4.shape
    ref4 = _reference_forward(x, params4, 4)
    assert jnp.allclose(out4, ref4, atol=1e-4, rtol=1e-4), "scale=4 mismatch"

    # scale=3: r=3 path (single stage, auto tile selection).
    params3 = init_params(key, n_channels, 3)
    out3 = jax.block_until_ready(
        upsample_block_forward_jit(x, params3, scale=3,
                                   compute_dtype=jnp.float32))
    assert out3.shape == (N, n_channels, 3 * H, 3 * W), out3.shape
    ref3 = _reference_forward(x, params3, 3)
    assert jnp.allclose(out3, ref3, atol=1e-4, rtol=1e-4), "scale=3 mismatch"

    # bf16 activations/weights (halved HBM/VMEM traffic), f32 MXU accumulation.
    out2_bf16 = jax.block_until_ready(
        upsample_block_forward_jit(x, params2, scale=2,
                                   compute_dtype=jnp.bfloat16, tile_h=8))
    assert jnp.allclose(out2_bf16, ref2, atol=5e-2, rtol=5e-2), "bf16 mismatch"

    print("KERNEL_OK")
</pallas_src>

<mosaic_0001>
module attributes {stable_mosaic.version = 11 : i64} {
  func.func @_conv3x3_relu_ps_kernel(%arg0: i32, %arg1: i32, %arg2: memref<1x8x16x4xf32, #tpu.memory_space<vmem>>, %arg3: memref<1x1x16x4xf32, #tpu.memory_space<vmem>>, %arg4: memref<1x1x16x4xf32, #tpu.memory_space<vmem>>, %arg5: memref<36x16xf32, #tpu.memory_space<vmem>>, %arg6: memref<1x16xf32, #tpu.memory_space<vmem>>, %arg7: memref<1x8x2x16x8xf32, #tpu.memory_space<vmem>>) attributes {dimension_semantics = [#tpu.dimension_semantics<parallel>, #tpu.dimension_semantics<parallel>], iteration_bounds = array<i64: 2, 2>, scalar_prefetch = 0 : i64, scratch_operands = 0 : i64, tpu.core_type = #tpu.core_type<tc>, window_params = [{transform_indices = @transform_0, window_bounds = array<i64: 1, 8, 16, 4>}, {transform_indices = @transform_1, window_bounds = array<i64: 1, 1, 16, 4>}, {transform_indices = @transform_2, window_bounds = array<i64: 1, 1, 16, 4>}, {pipeline_mode = #tpu.pipeline_mode<synchronous>, transform_indices = @transform_3, window_bounds = array<i64: 36, 16>}, {pipeline_mode = #tpu.pipeline_mode<synchronous>, transform_indices = @transform_4, window_bounds = array<i64: 1, 16>}, {transform_indices = @transform_5, window_bounds = array<i64: 1, 8, 2, 16, 8>}]} {
    %c0 = arith.constant 0 : index
    %c0_0 = arith.constant 0 : index
    %c0_1 = arith.constant 0 : index
    %c0_2 = arith.constant 0 : index
    %0 = vector.load %arg3[%c0, %c0_0, %c0_1, %c0_2] : memref<1x1x16x4xf32, #tpu.memory_space<vmem>>, vector<1x1x16x4xf32>
    %1 = vector.shape_cast %0 : vector<1x1x16x4xf32> to vector<1x16x4xf32>
    %c0_3 = arith.constant 0 : index
    %c0_4 = arith.constant 0 : index
    %c0_5 = arith.constant 0 : index
    %c0_6 = arith.constant 0 : index
    %2 = vector.load %arg2[%c0_3, %c0_4, %c0_5, %c0_6] : memref<1x8x16x4xf32, #tpu.memory_space<vmem>>, vector<1x8x16x4xf32>
    %3 = vector.shape_cast %2 : vector<1x8x16x4xf32> to vector<8x16x4xf32>
    %c0_7 = arith.constant 0 : index
    %c0_8 = arith.constant 0 : index
    %c0_9 = arith.constant 0 : index
    %c0_10 = arith.constant 0 : index
    %4 = vector.load %arg4[%c0_7, %c0_8, %c0_9, %c0_10] : memref<1x1x16x4xf32, #tpu.memory_space<vmem>>, vector<1x1x16x4xf32>
    %5 = vector.shape_cast %4 : vector<1x1x16x4xf32> to vector<1x16x4xf32>
    %6 = tpu.concatenate %1, %3, %5 in 0 : vector<1x16x4xf32>, vector<8x16x4xf32>, vector<1x16x4xf32> -> vector<10x16x4xf32>
    %7 = vector.shape_cast %6 : vector<10x16x4xf32> to vector<160x4xf32>
    %8 = tpu.iota {dimensions = array<i32: 0>} : vector<160x1xi32>
    %c16_i32 = arith.constant 16 : i32
    %c0_i32 = arith.constant 0 : i32
    %9 = arith.cmpi eq, %c16_i32, %c0_i32 : i32
    %c1_i32 = arith.constant 1 : i32
    %10 = arith.select %9, %c1_i32, %c16_i32 : i32
    %11 = vector.broadcast %10 : i32 to vector<160x1xi32>
    %12 = arith.remsi %8, %11 : vector<160x1xi32>
    %c0_i32_11 = arith.constant 0 : i32
    %13 = vector.broadcast %c0_i32_11 : i32 to vector<160x1xi32>
    %14 = arith.cmpi ne, %12, %13 : vector<160x1xi32>
    %c0_i32_12 = arith.constant 0 : i32
    %15 = vector.broadcast %c0_i32_12 : i32 to vector<160x1xi32>
    %16 = arith.cmpi slt, %12, %15 : vector<160x1xi32>
    %c0_i32_13 = arith.constant 0 : i32
    %17 = arith.cmpi slt, %10, %c0_i32_13 : i32
    %18 = vector.broadcast %17 : i1 to vector<160x1xi1>
    %19 = vector.broadcast %18 : vector<160x1xi1> to vector<160x1xi1>
    %20 = arith.xori %16, %19 : vector<160x1xi1>
    %21 = arith.andi %20, %14 : vector<160x1xi1>
    %22 = vector.broadcast %10 : i32 to vector<160x1xi32>
    %23 = arith.addi %12, %22 : vector<160x1xi32>
    %24 = arith.select %21, %23, %12 : vector<160x1xi1>, vector<160x1xi32>
    %c0_i32_14 = arith.constant 0 : i32
    %25 = vector.broadcast %c0_i32_14 : i32 to vector<160x1xi32>
    %26 = arith.cmpi ne, %24, %25 : vector<160x1xi32>
    %27 = arith.extui %26 : vector<160x1xi1> to vector<160x1xi32>
    %28 = arith.sitofp %27 : vector<160x1xi32> to vector<160x1xf32>
    %c15_i32 = arith.constant 15 : i32
    %29 = vector.broadcast %c15_i32 : i32 to vector<160x1xi32>
    %30 = arith.cmpi ne, %24, %29 : vector<160x1xi32>
    %31 = arith.extui %30 : vector<160x1xi1> to vector<160x1xi32>
    %32 = arith.sitofp %31 : vector<160x1xi32> to vector<160x1xf32>
    %c1_i32_15 = arith.constant 1 : i32
    %33 = tpu.dynamic_rotate %7 by %c1_i32_15 dim 0 : vector<160x4xf32>, i32 -> vector<160x4xf32>
    %34 = vector.broadcast %28 : vector<160x1xf32> to vector<160x4xf32>
    %35 = arith.mulf %33, %34 : vector<160x4xf32>
    %c159_i32 = arith.constant 159 : i32
    %36 = tpu.dynamic_rotate %7 by %c159_i32 dim 0 : vector<160x4xf32>, i32 -> vector<160x4xf32>
    %37 = vector.broadcast %32 : vector<160x1xf32> to vector<160x4xf32>
    %38 = arith.mulf %36, %37 : vector<160x4xf32>
    %39 = vector.extract_strided_slice %35 {offsets = [0, 0], sizes = [128, 4], strides = [1, 1]} : vector<160x4xf32> to vector<128x4xf32>
    %40 = vector.extract_strided_slice %7 {offsets = [0, 0], sizes = [128, 4], strides = [1, 1]} : vector<160x4xf32> to vector<128x4xf32>
    %41 = vector.extract_strided_slice %38 {offsets = [0, 0], sizes = [128, 4], strides = [1, 1]} : vector<160x4xf32> to vector<128x4xf32>
    %42 = vector.extract_strided_slice %35 {offsets = [16, 0], sizes = [128, 4], strides = [1, 1]} : vector<160x4xf32> to vector<128x4xf32>
    %43 = vector.extract_strided_slice %7 {offsets = [16, 0], sizes = [128, 4], strides = [1, 1]} : vector<160x4xf32> to vector<128x4xf32>
    %44 = vector.extract_strided_slice %38 {offsets = [16, 0], sizes = [128, 4], strides = [1, 1]} : vector<160x4xf32> to vector<128x4xf32>
    %45 = vector.extract_strided_slice %35 {offsets = [32, 0], sizes = [128, 4], strides = [1, 1]} : vector<160x4xf32> to vector<128x4xf32>
    %46 = vector.extract_strided_slice %7 {offsets = [32, 0], sizes = [128, 4], strides = [1, 1]} : vector<160x4xf32> to vector<128x4xf32>
    %47 = vector.extract_strided_slice %38 {offsets = [32, 0], sizes = [128, 4], strides = [1, 1]} : vector<160x4xf32> to vector<128x4xf32>
    %48 = tpu.concatenate %39, %40, %41, %42, %43, %44, %45, %46, %47 in 1 : vector<128x4xf32>, vector<128x4xf32>, vector<128x4xf32>, vector<128x4xf32>, vector<128x4xf32>, vector<128x4xf32>, vector<128x4xf32>, vector<128x4xf32>, vector<128x4xf32> -> vector<128x36xf32>
    %c0_16 = arith.constant 0 : index
    %c0_17 = arith.constant 0 : index
    %49 = vector.load %arg5[%c0_16, %c0_17] : memref<36x16xf32, #tpu.memory_space<vmem>>, vector<36x16xf32>
    %cst = arith.constant dense<0.000000e+00> : vector<128x16xf32>
    %50 = tpu.matmul %48, %49, %cst {dimension_numbers = #tpu.dot_dimension_numbers<[1], [0], [0], [1], [0, 0, 1, 1], [], []>} : vector<128x36xf32>, vector<36x16xf32>, vector<128x16xf32> -> vector<128x16xf32>
    %c0_18 = arith.constant 0 : index
    %c0_19 = arith.constant 0 : index
    %51 = vector.load %arg6[%c0_18, %c0_19] : memref<1x16xf32, #tpu.memory_space<vmem>>, vector<1x16xf32>
    %52 = vector.broadcast %51 : vector<1x16xf32> to vector<128x16xf32>
    %53 = arith.addf %50, %52 : vector<128x16xf32>
    %cst_20 = arith.constant 0.000000e+00 : f32
    %54 = vector.broadcast %cst_20 : f32 to vector<128x16xf32>
    %55 = arith.maximumf %53, %54 : vector<128x16xf32>
    %56 = vector.shape_cast %55 : vector<128x16xf32> to vector<8x16x16xf32>
    %57 = vector.extract_strided_slice %56 {offsets = [0, 0, 0], sizes = [8, 16, 8], strides = [1, 1, 1]} : vector<8x16x16xf32> to vector<8x16x8xf32>
    %c0_21 = arith.constant 0 : index
    %c0_22 = arith.constant 0 : index
    %c0_23 = arith.constant 0 : index
    %c0_24 = arith.constant 0 : index
    %c0_25 = arith.constant 0 : index
    %58 = vector.load %arg7[%c0_21, %c0_22, %c0_23, %c0_24, %c0_25] : memref<1x8x2x16x8xf32, #tpu.memory_space<vmem>>, vector<1x8x1x16x8xf32>
    %59 = vector.shape_cast %58 : vector<1x8x1x16x8xf32> to vector<8x16x8xf32>
    %60 = vector.shape_cast %57 : vector<8x16x8xf32> to vector<1x8x1x16x8xf32>
    tpu.vector_store %arg7[%c0_21, %c0_22, %c0_23, %c0_24, %c0_25], %60 {strides = array<i32>} : memref<1x8x2x16x8xf32, #tpu.memory_space<vmem>>, vector<1x8x1x16x8xf32>,
    %61 = vector.extract_strided_slice %56 {offsets = [0, 0, 8], sizes = [8, 16, 8], strides = [1, 1, 1]} : vector<8x16x16xf32> to vector<8x16x8xf32>
    %c0_26 = arith.constant 0 : index
    %c0_27 = arith.constant 0 : index
    %c1 = arith.constant 1 : index
    %c0_28 = arith.constant 0 : index
    %c0_29 = arith.constant 0 : index
    %62 = vector.load %arg7[%c0_26, %c0_27, %c1, %c0_28, %c0_29] : memref<1x8x2x16x8xf32, #tpu.memory_space<vmem>>, vector<1x8x1x16x8xf32>
    %63 = vector.shape_cast %62 : vector<1x8x1x16x8xf32> to vector<8x16x8xf32>
    %64 = vector.shape_cast %61 : vector<8x16x8xf32> to vector<1x8x1x16x8xf32>
    tpu.vector_store %arg7[%c0_26, %c0_27, %c1, %c0_28, %c0_29], %64 {strides = array<i32>} : memref<1x8x2x16x8xf32, #tpu.memory_space<vmem>>, vector<1x8x1x16x8xf32>,
    return
  }
  func.func @transform_0(%arg0: i32, %arg1: i32) -> (i32, i32, i32, i32) {
    %c0_i32 = arith.constant 0 : i32
    %c0_i32_0 = arith.constant 0 : i32
    %c0_i32_1 = arith.constant 0 : i32
    return %arg0, %arg1, %c0_i32, %c0_i32_0 : i32, i32, i32, i32
  }
  func.func @transform_1(%arg0: i32, %arg1: i32) -> (i32, i32, i32, i32) {
    %c0_i32 = arith.constant 0 : i32
    %c0_i32_0 = arith.constant 0 : i32
    %c0_i32_1 = arith.constant 0 : i32
    return %arg0, %arg1, %c0_i32, %c0_i32_0 : i32, i32, i32, i32
  }
  func.func @transform_2(%arg0: i32, %arg1: i32) -> (i32, i32, i32, i32) {
    %c0_i32 = arith.constant 0 : i32
    %c0_i32_0 = arith.constant 0 : i32
    %c0_i32_1 = arith.constant 0 : i32
    return %arg0, %arg1, %c0_i32, %c0_i32_0 : i32, i32, i32, i32
  }
  func.func @transform_3(%arg0: i32, %arg1: i32) -> (i32, i32) {
    %c0_i32 = arith.constant 0 : i32
    %c0_i32_0 = arith.constant 0 : i32
    %c0_i32_1 = arith.constant 0 : i32
    return %c0_i32, %c0_i32_0 : i32, i32
  }
  func.func @transform_4(%arg0: i32, %arg1: i32) -> (i32, i32) {
    %c0_i32 = arith.constant 0 : i32
    %c0_i32_0 = arith.constant 0 : i32
    %c0_i32_1 = arith.constant 0 : i32
    return %c0_i32, %c0_i32_0 : i32, i32
  }
  func.func @transform_5(%arg0: i32, %arg1: i32) -> (i32, i32, i32, i32, i32) {
    %c0_i32 = arith.constant 0 : i32
    %c0_i32_0 = arith.constant 0 : i32
    %c0_i32_1 = arith.constant 0 : i32
    %c0_i32_2 = arith.constant 0 : i32
    return %arg0, %arg1, %c0_i32, %c0_i32_0, %c0_i32_1 : i32, i32, i32, i32, i32
  }
}

</mosaic_0001>

<llo_original>
// kernel: upsample_block_forward.1
$region0: #{upsample_block_forward.1}
  #allocation0 [shape = 'u32[]', space=smem, size = 0x4, offset = 0x4, fixed_abs, tag = 'smem constant byte address 0x4 - core index']
  #allocation1 [shape = 'u32[144,128]{1,0:T(1,128)}', space=vmem, size = 0x12000, scoped, tag = 'internal scratch']
  %s0 = inlined_call_operand.vmem [shape: f32[2,16,16,4], index: 0, kind: input, shape index: {}]
  %s1 = inlined_call_operand.vmem [shape: f32[2,2,16,4], index: 1, kind: input, shape index: {}]
  %s2 = inlined_call_operand.vmem [shape: f32[2,2,16,4], index: 2, kind: input, shape index: {}]
  %s3 = inlined_call_operand.vmem [shape: f32[36,16], index: 3, kind: input, shape index: {}]
  %s4 = inlined_call_operand.vmem [shape: f32[1,16], index: 4, kind: input, shape index: {}]
  %s5 = inlined_call_operand.vmem [shape: f32[2,16,2,16,8], index: 5, kind: output, shape index: {}]
  %s6 = sld [smem:[#allocation0]]
  $region53: #{upsample_block_forward.1} parent=0
    _
  %s8 = ssub.s32 1, %s6
  %s9 = scalar_select 0, %s8, %s6
  loop: start=0, step=1, limit=6
  $region2: #{upsample_block_forward.1} parent=0 // loop_pre_header
    _
  $region3: #{upsample_block_forward.1} parent=0 // loop_header
    %s11 = sphi 0, %s15
    %p12 = scmp.ge.s32.totalorder %s11, 6
    %s18 = sphi 0, %s30
    %s19 = sphi 0, %s26
    %s20 = sphi 0, %s18
    %s21 = sphi 0, %s19
    %s22 = sphi 0, %s20
    %s23 = sphi 0, %s21
    %s35 = sphi 0, %s37
    %s38 = sphi 0, %s35
    %s39 = sphi 0, %s38
    %s55 = sphi 0, %s39
    %s63 = sphi 0, %s65
    %s66 = sphi 0, %s63
    %s67 = sphi 0, %s66
    %s83 = sphi 0, %s67
    %s91 = sphi 0, %s93
    %s94 = sphi 0, %s91
    %s95 = sphi 0, %s94
    %s111 = sphi 0, %s95
    %s115 = sphi 0, %s115
    %s117 = sphi 0, %s115
    %s118 = sphi 0, %s117
    %s132 = sphi 0, %s118
    %s136 = sphi 0, %s136
    %s138 = sphi 0, %s136
    %s139 = sphi 0, %s138
    %s153 = sphi 0, %s139
    %s161 = sphi 0, %s163
    %s164 = sphi 0, %s161
    %s165 = sphi 0, %s164
    %s181 = sphi 0, %s165
  $region4: #{upsample_block_forward.1} parent=0 // loop_header_branch
    %14 = sbr.rel (%p12) target = $region8
  $region5: #{upsample_block_forward.1} parent=0 // loop_body
    %s16 = ssub.s32 %s11, 1
    %s17 = ssub.s32 %s11, 2
    %s24 = sadd.s32 1, %s19
    %p25 = scmp.ge.s32.totalorder %s24, 2
    %s26 = scalar_select %p25, 0, %s24
    %s27 = sadd.s32 1, %s18
    %s28 = scalar_select %p25, %s27, %s18
    %p29 = scmp.ge.s32.totalorder %s28, 2
    %s30 = scalar_select %p29, 0, %s28
    %s31 = ssub.s32 %s18, %s30
    %s32 = ssub.s32 %s19, %s26
    %s33 = sor.u32 %s31, %s32
    %p34 = scmp.eq.s32.totalorder %s33, 0
    %s36 = sadd.s32 %s35, 1
    %s37 = scalar_select %p34, %s35, %s36
    %p40 = pneg %p34
    %p41 = scmp.eq.s32.totalorder %s11, 3
    %p42 = por %p40, %p41
    %p43 = scmp.ne.s32.totalorder %s35, %s38
    %p44 = scmp.eq.s32.totalorder %s11, 0
    %p45 = por %p43, %p44
    %p46 = scmp.ne.s32.totalorder %s35, %s38
    %p47 = scmp.eq.s32.totalorder %s16, 3
    %p48 = por %p46, %p47
    %p49 = scmp.ne.s32.totalorder %s38, %s39
    %p50 = scmp.eq.s32.totalorder %s16, 0
    %p51 = por %p49, %p50
    %p52 = scmp.ne.s32.totalorder %s38, %s39
    %p53 = scmp.eq.s32.totalorder %s17, 3
    %p54 = por %p52, %p53
    %p56 = scmp.ne.s32.totalorder %s39, %s55
    %p57 = scmp.eq.s32.totalorder %s17, 0
    %p58 = por %p56, %p57
    %s59 = ssub.s32 %s18, %s30
    %s60 = ssub.s32 %s19, %s26
    %s61 = sor.u32 %s59, %s60
    %p62 = scmp.eq.s32.totalorder %s61, 0
    %s64 = sadd.s32 %s63, 1
    %s65 = scalar_select %p62, %s63, %s64
    %p68 = pneg %p62
    %p69 = scmp.eq.s32.totalorder %s11, 3
    %p70 = por %p68, %p69
    %p71 = scmp.ne.s32.totalorder %s63, %s66
    %p72 = scmp.eq.s32.totalorder %s11, 0
    %p73 = por %p71, %p72
    %p74 = scmp.ne.s32.totalorder %s63, %s66
    %p75 = scmp.eq.s32.totalorder %s16, 3
    %p76 = por %p74, %p75
    %p77 = scmp.ne.s32.totalorder %s66, %s67
    %p78 = scmp.eq.s32.totalorder %s16, 0
    %p79 = por %p77, %p78
    %p80 = scmp.ne.s32.totalorder %s66, %s67
    %p81 = scmp.eq.s32.totalorder %s17, 3
    %p82 = por %p80, %p81
    %p84 = scmp.ne.s32.totalorder %s67, %s83
    %p85 = scmp.eq.s32.totalorder %s17, 0
    %p86 = por %p84, %p85
    %s87 = ssub.s32 %s18, %s30
    %s88 = ssub.s32 %s19, %s26
    %s89 = sor.u32 %s87, %s88
    %p90 = scmp.eq.s32.totalorder %s89, 0
    %s92 = sadd.s32 %s91, 1
    %s93 = scalar_select %p90, %s91, %s92
    %p96 = pneg %p90
    %p97 = scmp.eq.s32.totalorder %s11, 3
    %p98 = por %p96, %p97
    %p99 = scmp.ne.s32.totalorder %s91, %s94
    %p100 = scmp.eq.s32.totalorder %s11, 0
    %p101 = por %p99, %p100
    %p102 = scmp.ne.s32.totalorder %s91, %s94
    %p103 = scmp.eq.s32.totalorder %s16, 3
    %p104 = por %p102, %p103
    %p105 = scmp.ne.s32.totalorder %s94, %s95
    %p106 = scmp.eq.s32.totalorder %s16, 0
    %p107 = por %p105, %p106
    %p108 = scmp.ne.s32.totalorder %s94, %s95
    %p109 = scmp.eq.s32.totalorder %s17, 3
    %p110 = por %p108, %p109
    %p112 = scmp.ne.s32.totalorder %s95, %s111
    %p113 = scmp.eq.s32.totalorder %s17, 0
    %p114 = por %p112, %p113
    %s116 = sadd.s32 %s115, 1
    %p119 = scmp.eq.s32.totalorder %s11, 3
    %p120 = scmp.ne.s32.totalorder %s115, %s117
    %p121 = scmp.eq.s32.totalorder %s11, 0
    %p122 = por %p120, %p121
    %p123 = scmp.ne.s32.totalorder %s115, %s117
    %p124 = scmp.eq.s32.totalorder %s16, 3
    %p125 = por %p123, %p124
    %p126 = scmp.ne.s32.totalorder %s117, %s118
    %p127 = scmp.eq.s32.totalorder %s16, 0
    %p128 = por %p126, %p127
    %p129 = scmp.ne.s32.totalorder %s117, %s118
    %p130 = scmp.eq.s32.totalorder %s17, 3
    %p131 = por %p129, %p130
    %p133 = scmp.ne.s32.totalorder %s118, %s132
    %p134 = scmp.eq.s32.totalorder %s17, 0
    %p135 = por %p133, %p134
    %s137 = sadd.s32 %s136, 1
    %p140 = scmp.eq.s32.totalorder %s11, 3
    %p141 = scmp.ne.s32.totalorder %s136, %s138
    %p142 = scmp.eq.s32.totalorder %s11, 0
    %p143 = por %p141, %p142
    %p144 = scmp.ne.s32.totalorder %s136, %s138
    %p145 = scmp.eq.s32.totalorder %s16, 3
    %p146 = por %p144, %p145
    %p147 = scmp.ne.s32.totalorder %s138, %s139
    %p148 = scmp.eq.s32.totalorder %s16, 0
    %p149 = por %p147, %p148
    %p150 = scmp.ne.s32.totalorder %s138, %s139
    %p151 = scmp.eq.s32.totalorder %s17, 3
    %p152 = por %p150, %p151
    %p154 = scmp.ne.s32.totalorder %s139, %s153
    %p155 = scmp.eq.s32.totalorder %s17, 0
    %p156 = por %p154, %p155
    %s157 = ssub.s32 %s18, %s30
    %s158 = ssub.s32 %s19, %s26
    %s159 = sor.u32 %s157, %s158
    %p160 = scmp.eq.s32.totalorder %s159, 0
    %s162 = sadd.s32 %s161, 1
    %s163 = scalar_select %p160, %s161, %s162
    %p166 = pneg %p160
    %p167 = scmp.eq.s32.totalorder %s11, 3
    %p168 = por %p166, %p167
    %p169 = scmp.ne.s32.totalorder %s161, %s164
    %p170 = scmp.eq.s32.totalorder %s11, 0
    %p171 = por %p169, %p170
    %p172 = scmp.ne.s32.totalorder %s161, %s164
    %p173 = scmp.eq.s32.totalorder %s16, 3
    %p174 = por %p172, %p173
    %p175 = scmp.ne.s32.totalorder %s164, %s165
    %p176 = scmp.eq.s32.totalorder %s16, 0
    %p177 = por %p175, %p176
    %p178 = scmp.ne.s32.totalorder %s164, %s165
    %p179 = scmp.eq.s32.totalorder %s17, 3
    %p180 = por %p178, %p179
    %p182 = scmp.ne.s32.totalorder %s165, %s181
    %p183 = scmp.eq.s32.totalorder %s17, 0
    %p184 = por %p182, %p183
    %p185 = scmp.le.s32.totalorder 1, %s11
    %p186 = scmp.lt.s32.totalorder %s11, 5
    %p187 = pnand %p185, %p186
    %p188 = pneg %p187
    // Predicated region
    $region9: #{upsample_block_forward.1} parent=5 // pred_check
      _
    $region10: #{upsample_block_forward.1} parent=5 // pred_check_branch
      %190 = sbr.rel (%p187) target = $region12
    $region11: #{upsample_block_forward.1} parent=5 // pred_region
      %s191 = ssub.s32 %s11, 1
      // Predicated region
      $region13: #{upsample_block_forward.1} parent=11 // pred_check
        %p192 = pneg %p128
      $region14: #{upsample_block_forward.1} parent=11 // pred_check_branch
        %194 = sbr.rel (%p192) target = $region16
      $region15: #{upsample_block_forward.1} parent=11 // pred_region
        _
      $region16: #{upsample_block_forward.1} parent=11 // pred_fallthru
        _
      // Predicated region
      $region17: #{upsample_block_forward.1} parent=11 // pred_check
        %p195 = pneg %p149
      $region18: #{upsample_block_forward.1} parent=11 // pred_check_branch
        %197 = sbr.rel (%p195) target = $region20
      $region19: #{upsample_block_forward.1} parent=11 // pred_region
        _
      $region20: #{upsample_block_forward.1} parent=11 // pred_fallthru
        _
    $region12: #{upsample_block_forward.1} parent=5 // pred_fallthru
      _
    %p198 = scmp.lt.s32.totalorder %s11, 4
    // Predicated region
    $region21: #{upsample_block_forward.1} parent=5 // pred_check
      %p199 = pneg %p198
    $region22: #{upsample_block_forward.1} parent=5 // pred_check_branch
      %201 = sbr.rel (%p199) target = $region24
    $region23: #{upsample_block_forward.1} parent=5 // pred_region
      // Predicated region
      $region25: #{upsample_block_forward.1} parent=23 // pred_check
        %p202 = pneg %p45
      $region26: #{upsample_block_forward.1} parent=23 // pred_check_branch
        %204 = sbr.rel (%p202) target = $region28
      $region27: #{upsample_block_forward.1} parent=23 // pred_region
        %s205 = smul.u32 8, %s19
        %p206 = scmp.lt.s32.totalorder %s18, 1
        %s207 = scalar_select %p206, %s18, 1
        %p208 = scmp.lt.s32.totalorder %s205, 15
        %s209 = scalar_select %p208, %s205, 15
        %s210 = smul.addr %s209, 2
        %s211 = smul.addr %s207, 32
        %s212 = sadd.s32 %s210, %s211
        %s213 = smul.addr %s212, 8
        %s214 = scalar_lea.vmem %s0, %s213
        %s215 = smul.u32 8, %s19
      $region28: #{upsample_block_forward.1} parent=23 // pred_fallthru
        _
      // Predicated region
      $region29: #{upsample_block_forward.1} parent=23 // pred_check
        %p216 = pneg %p73
      $region30: #{upsample_block_forward.1} parent=23 // pred_check_branch
        %218 = sbr.rel (%p216) target = $region32
      $region31: #{upsample_block_forward.1} parent=23 // pred_region
        %p219 = scmp.lt.s32.totalorder %s18, 1
        %s220 = scalar_select %p219, %s18, 1
        %p221 = scmp.lt.s32.totalorder %s19, 1
        %s222 = scalar_select %p221, %s19, 1
        %s223 = smul.addr %s222, 2
        %s224 = smul.addr %s220, 4
        %s225 = sadd.s32 %s223, %s224
        %s226 = smul.addr %s225, 8
        %s227 = scalar_lea.vmem %s1, %s226
      $region32: #{upsample_block_forward.1} parent=23 // pred_fallthru
        _
      // Predicated region
      $region33: #{upsample_block_forward.1} parent=23 // pred_check
        %p228 = pneg %p101
      $region34: #{upsample_block_forward.1} parent=23 // pred_check_branch
        %230 = sbr.rel (%p228) target = $region36
      $region35: #{upsample_block_forward.1} parent=23 // pred_region
        %p231 = scmp.lt.s32.totalorder %s18, 1
        %s232 = scalar_select %p231, %s18, 1
        %p233 = scmp.lt.s32.totalorder %s19, 1
        %s234 = scalar_select %p233, %s19, 1
        %s235 = smul.addr %s234, 2
        %s236 = smul.addr %s232, 4
        %s237 = sadd.s32 %s235, %s236
        %s238 = smul.addr %s237, 8
        %s239 = scalar_lea.vmem %s2, %s238
      $region36: #{upsample_block_forward.1} parent=23 // pred_fallthru
        _
    $region24: #{upsample_block_forward.1} parent=5 // pred_fallthru
      _
    %p240 = scmp.le.s32.totalorder 1, %s11
    %p241 = scmp.lt.s32.totalorder %s11, 5
    %p242 = pnand %p240, %p241
    %p243 = pneg %p242
    // Predicated region
    $region37: #{upsample_block_forward.1} parent=5 // pred_check
      _
    $region38: #{upsample_block_forward.1} parent=5 // pred_check_branch
      %245 = sbr.rel (%p242) target = $region40
    $region39: #{upsample_block_forward.1} parent=5 // pred_region
      %s246 = ssub.s32 %s11, 1
      %s247 = smul.u32 8, %s21
      %p248 = scmp.lt.s32.totalorder %s20, 1
      %s249 = scalar_select %p248, %s20, 1
      %p250 = scmp.lt.s32.totalorder %s247, 15
      %s251 = scalar_select %p250, %s247, 15
      %s252 = smul.addr %s251, 2
      %s253 = smul.addr %s249, 32
      %s254 = sadd.s32 %s252, %s253
      %s255 = smul.addr %s254, 8
      %s256 = scalar_lea.vmem %s0, %s255
      %p257 = pneg %p51
      %p258 = pneg %p48
      %p259 = scmp.lt.s32.totalorder %s20, 1
      %s260 = scalar_select %p259, %s20, 1
      %p261 = scmp.lt.s32.totalorder %s21, 1
      %s262 = scalar_select %p261, %s21, 1
      %s263 = smul.addr %s262, 2
      %s264 = smul.addr %s260, 4
      %s265 = sadd.s32 %s263, %s264
      %s266 = smul.addr %s265, 8
      %s267 = scalar_lea.vmem %s1, %s266
      %p268 = pneg %p79
      %p269 = pneg %p76
      %p270 = scmp.lt.s32.totalorder %s20, 1
      %s271 = scalar_select %p270, %s20, 1
      %p272 = scmp.lt.s32.totalorder %s21, 1
      %s273 = scalar_select %p272, %s21, 1
      %s274 = smul.addr %s273, 2
      %s275 = smul.addr %s271, 4
      %s276 = sadd.s32 %s274, %s275
      %s277 = smul.addr %s276, 8
      %s278 = scalar_lea.vmem %s2, %s277
      %p279 = pneg %p107
      %p280 = pneg %p104
      %p281 = pneg %p128
      %p282 = pneg %p125
      %p283 = pneg %p149
      %p284 = pneg %p146
      %p285 = pneg %p177
      %p286 = pneg %p174
      %s287 = smul.u32 8, %s21
      %p288 = scmp.lt.s32.totalorder %s20, 1
      %s289 = scalar_select %p288, %s20, 1
      %p290 = scmp.lt.s32.totalorder %s287, 15
      %s291 = scalar_select %p290, %s287, 15
      %s292 = smul.addr %s291, 4
      %s293 = smul.addr %s289, 64
      %s294 = sadd.s32 %s292, %s293
      %s295 = smul.addr %s294, 8
      %s296 = scalar_lea.vmem %s5, %s295
      %s297 = smul.u32 8, %s21
      %p298 = scmp.lt.s32.totalorder %s20, 1
      %s299 = scalar_select %p298, %s20, 1
      %p300 = scmp.lt.s32.totalorder %s297, 15
      %s301 = scalar_select %p300, %s297, 15
      %s302 = smul.addr %s301, 2
      %s303 = smul.addr %s299, 32
      %s304 = sadd.s32 %s302, %s303
      %s305 = smul.addr %s304, 8
      %s306 = scalar_lea.vmem %s0, %s305
      %s307 = smul.u32 8, %s21
      %p308 = scmp.lt.s32.totalorder %s20, 1
      %s309 = scalar_select %p308, %s20, 1
      %p310 = scmp.lt.s32.totalorder %s21, 1
      %s311 = scalar_select %p310, %s21, 1
      %s312 = smul.addr %s311, 2
      %s313 = smul.addr %s309, 4
      %s314 = sadd.s32 %s312, %s313
      %s315 = smul.addr %s314, 8
      %s316 = scalar_lea.vmem %s1, %s315
      %p317 = scmp.lt.s32.totalorder %s20, 1
      %s318 = scalar_select %p317, %s20, 1
      %p319 = scmp.lt.s32.totalorder %s21, 1
      %s320 = scalar_select %p319, %s21, 1
      %s321 = smul.addr %s320, 2
      %s322 = smul.addr %s318, 4
      %s323 = sadd.s32 %s321, %s322
      %s324 = smul.addr %s323, 8
      %s325 = scalar_lea.vmem %s2, %s324
      %s326 = smul.u32 8, %s21
      %p327 = scmp.lt.s32.totalorder %s20, 1
      %s328 = scalar_select %p327, %s20, 1
      %p329 = scmp.lt.s32.totalorder %s326, 15
      %s330 = scalar_select %p329, %s326, 15
      %s331 = smul.addr %s330, 4
      %s332 = smul.addr %s328, 64
      %s333 = sadd.s32 %s331, %s332
      %s334 = smul.addr %s333, 8
      %s335 = scalar_lea.vmem %s5, %s334
      %s336 = smul.u32 8, %s21
      %v337 = vld [vmem:[%s316] sm:$0xff]
      %v338 = vld [vmem:[%s316 + $0x8] sm:$0xff]
      %v339 = vld [vmem:[%s306] sm:$0xff]
      %v340 = vld [vmem:[%s306 + $0x8] sm:$0xff]
      %v341 = vld [vmem:[%s306 + $0x10] sm:$0xff]
      %v342 = vld [vmem:[%s306 + $0x18] sm:$0xff]
      %v343 = vld [vmem:[%s306 + $0x20] sm:$0xff]
      %v344 = vld [vmem:[%s306 + $0x28] sm:$0xff]
      %v345 = vld [vmem:[%s306 + $0x30] sm:$0xff]
      %v346 = vld [vmem:[%s306 + $0x38] sm:$0xff]
      %v347 = vld [vmem:[%s306 + $0x40] sm:$0xff]
      %v348 = vld [vmem:[%s306 + $0x48] sm:$0xff]
      %v349 = vld [vmem:[%s306 + $0x50] sm:$0xff]
      %v350 = vld [vmem:[%s306 + $0x58] sm:$0xff]
      %v351 = vld [vmem:[%s306 + $0x60] sm:$0xff]
      %v352 = vld [vmem:[%s306 + $0x68] sm:$0xff]
      %v353 = vld [vmem:[%s306 + $0x70] sm:$0xff]
      %v354 = vld [vmem:[%s306 + $0x78] sm:$0xff]
      %v355 = vld [vmem:[%s325] sm:$0xff]
      %v356 = vld [vmem:[%s325 + $0x8] sm:$0xff]
      %v357 = vlaneseq
      %v358 = vshrl.u32 %v357, 7
      %v359 = vadd.s32 %v358, 8
      %v360 = vadd.s32 %v358, 16
      %v361 = vadd.s32 %v358, 24
      %v362 = vadd.s32 %v358, 32
      %v363 = vadd.s32 %v358, 40
      %v364 = vadd.s32 %v358, 48
      %v365 = vadd.s32 %v358, 56
      %v366 = vadd.s32 %v358, 64
      %v367 = vadd.s32 %v358, 72
      %v368 = vadd.s32 %v358, 80
      %v369 = vadd.s32 %v358, 88
      %v370 = vadd.s32 %v358, 96
      %v371 = vadd.s32 %v358, 104
      %v372 = vadd.s32 %v358, 112
      %v373 = vadd.s32 %v358, 120
      %v374 = vadd.s32 %v358, 128
      %v375 = vadd.s32 %v358, 136
      %v376 = vadd.s32 %v358, 144
      %v377 = vadd.s32 %v358, 152
      %vm378 = vcmp.lt.s32.totalorder %v358, 0
      %v379 = vsub.s32 0, %v358
      %v380 = vsel %vm378, %v379, %v358
      %v381 = vshrl.u32 %v380, 4
      %v382 = vand.u32 %v380, 15
      %v383 = vsub.s32 0, %v382
      %v384 = vsel %vm378, %v383, %v382
      %vm385 = vcmp.lt.s32.totalorder %v359, 0
      %v386 = vsub.s32 0, %v359
      %v387 = vsel %vm385, %v386, %v359
      %v388 = vshrl.u32 %v387, 4
      %v389 = vand.u32 %v387, 15
      %v390 = vsub.s32 0, %v389
      %v391 = vsel %vm385, %v390, %v389
      %vm392 = vcmp.lt.s32.totalorder %v360, 0
      %v393 = vsub.s32 0, %v360
      %v394 = vsel %vm392, %v393, %v360
      %v395 = vshrl.u32 %v394, 4
      %v396 = vand.u32 %v394, 15
      %v397 = vsub.s32 0, %v396
      %v398 = vsel %vm392, %v397, %v396
      %vm399 = vcmp.lt.s32.totalorder %v361, 0
      %v400 = vsub.s32 0, %v361
      %v401 = vsel %vm399, %v400, %v361
      %v402 = vshrl.u32 %v401, 4
      %v403 = vand.u32 %v401, 15
      %v404 = vsub.s32 0, %v403
      %v405 = vsel %vm399, %v404, %v403
      %vm406 = vcmp.lt.s32.totalorder %v362, 0
      %v407 = vsub.s32 0, %v362
      %v408 = vsel %vm406, %v407, %v362
      %v409 = vshrl.u32 %v408, 4
      %v410 = vand.u32 %v408, 15
      %v411 = vsub.s32 0, %v410
      %v412 = vsel %vm406, %v411, %v410
      %vm413 = vcmp.lt.s32.totalorder %v363, 0
      %v414 = vsub.s32 0, %v363
      %v415 = vsel %vm413, %v414, %v363
      %v416 = vshrl.u32 %v415, 4
      %v417 = vand.u32 %v415, 15
      %v418 = vsub.s32 0, %v417
      %v419 = vsel %vm413, %v418, %v417
      %vm420 = vcmp.lt.s32.totalorder %v364, 0
      %v421 = vsub.s32 0, %v364
      %v422 = vsel %vm420, %v421, %v364
      %v423 = vshrl.u32 %v422, 4
      %v424 = vand.u32 %v422, 15
      %v425 = vsub.s32 0, %v424
      %v426 = vsel %vm420, %v425, %v424
      %vm427 = vcmp.lt.s32.totalorder %v365, 0
      %v428 = vsub.s32 0, %v365
      %v429 = vsel %vm427, %v428, %v365
      %v430 = vshrl.u32 %v429, 4
      %v431 = vand.u32 %v429, 15
      %v432 = vsub.s32 0, %v431
      %v433 = vsel %vm427, %v432, %v431
      %vm434 = vcmp.lt.s32.totalorder %v366, 0
      %v435 = vsub.s32 0, %v366
      %v436 = vsel %vm434, %v435, %v366
      %v437 = vshrl.u32 %v436, 4
      %v438 = vand.u32 %v436, 15
      %v439 = vsub.s32 0, %v438
      %v440 = vsel %vm434, %v439, %v438
      %vm441 = vcmp.lt.s32.totalorder %v367, 0
      %v442 = vsub.s32 0, %v367
      %v443 = vsel %vm441, %v442, %v367
      %v444 = vshrl.u32 %v443, 4
      %v445 = vand.u32 %v443, 15
      %v446 = vsub.s32 0, %v445
      %v447 = vsel %vm441, %v446, %v445
      %vm448 = vcmp.lt.s32.totalorder %v368, 0
      %v449 = vsub.s32 0, %v368
      %v450 = vsel %vm448, %v449, %v368
      %v451 = vshrl.u32 %v450, 4
      %v452 = vand.u32 %v450, 15
      %v453 = vsub.s32 0, %v452
      %v454 = vsel %vm448, %v453, %v452
      %vm455 = vcmp.lt.s32.totalorder %v369, 0
      %v456 = vsub.s32 0, %v369
      %v457 = vsel %vm455, %v456, %v369
      %v458 = vshrl.u32 %v457, 4
      %v459 = vand.u32 %v457, 15
      %v460 = vsub.s32 0, %v459
      %v461 = vsel %vm455, %v460, %v459
      %vm462 = vcmp.lt.s32.totalorder %v370, 0
      %v463 = vsub.s32 0, %v370
      %v464 = vsel %vm462, %v463, %v370
      %v465 = vshrl.u32 %v464, 4
      %v466 = vand.u32 %v464, 15
      %v467 = vsub.s32 0, %v466
      %v468 = vsel %vm462, %v467, %v466
      %vm469 = vcmp.lt.s32.totalorder %v371, 0
      %v470 = vsub.s32 0, %v371
      %v471 = vsel %vm469, %v470, %v371
      %v472 = vshrl.u32 %v471, 4
      %v473 = vand.u32 %v471, 15
      %v474 = vsub.s32 0, %v473
      %v475 = vsel %vm469, %v474, %v473
      %vm476 = vcmp.lt.s32.totalorder %v372, 0
      %v477 = vsub.s32 0, %v372
      %v478 = vsel %vm476, %v477, %v372
      %v479 = vshrl.u32 %v478, 4
      %v480 = vand.u32 %v478, 15
      %v481 = vsub.s32 0, %v480
      %v482 = vsel %vm476, %v481, %v480
      %vm483 = vcmp.lt.s32.totalorder %v373, 0
      %v484 = vsub.s32 0, %v373
      %v485 = vsel %vm483, %v484, %v373
      %v486 = vshrl.u32 %v485, 4
      %v487 = vand.u32 %v485, 15
      %v488 = vsub.s32 0, %v487
      %v489 = vsel %vm483, %v488, %v487
      %vm490 = vcmp.lt.s32.totalorder %v374, 0
      %v491 = vsub.s32 0, %v374
      %v492 = vsel %vm490, %v491, %v374
      %v493 = vshrl.u32 %v492, 4
      %v494 = vand.u32 %v492, 15
      %v495 = vsub.s32 0, %v494
      %v496 = vsel %vm490, %v495, %v494
      %vm497 = vcmp.lt.s32.totalorder %v375, 0
      %v498 = vsub.s32 0, %v375
      %v499 = vsel %vm497, %v498, %v375
      %v500 = vshrl.u32 %v499, 4
      %v501 = vand.u32 %v499, 15
      %v502 = vsub.s32 0, %v501
      %v503 = vsel %vm497, %v502, %v501
      %vm504 = vcmp.lt.s32.totalorder %v376, 0
      %v505 = vsub.s32 0, %v376
      %v506 = vsel %vm504, %v505, %v376
      %v507 = vshrl.u32 %v506, 4
      %v508 = vand.u32 %v506, 15
      %v509 = vsub.s32 0, %v508
      %v510 = vsel %vm504, %v509, %v508
      %vm511 = vcmp.lt.s32.totalorder %v377, 0
      %v512 = vsub.s32 0, %v377
      %v513 = vsel %vm511, %v512, %v377
      %v514 = vshrl.u32 %v513, 4
      %v515 = vand.u32 %v513, 15
      %v516 = vsub.s32 0, %v515
      %v517 = vsel %vm511, %v516, %v515
      %vm518 = vcmp.ne.s32.totalorder %v384, 0
      %vm519 = vcmp.ne.s32.totalorder %v391, 0
      %vm520 = vcmp.ne.s32.totalorder %v398, 0
      %vm521 = vcmp.ne.s32.totalorder %v405, 0
      %vm522 = vcmp.ne.s32.totalorder %v412, 0
      %vm523 = vcmp.ne.s32.totalorder %v419, 0
      %vm524 = vcmp.ne.s32.totalorder %v426, 0
      %vm525 = vcmp.ne.s32.totalorder %v433, 0
      %vm526 = vcmp.ne.s32.totalorder %v440, 0
      %vm527 = vcmp.ne.s32.totalorder %v447, 0
      %vm528 = vcmp.ne.s32.totalorder %v454, 0
      %vm529 = vcmp.ne.s32.totalorder %v461, 0
      %vm530 = vcmp.ne.s32.totalorder %v468, 0
      %vm531 = vcmp.ne.s32.totalorder %v475, 0
      %vm532 = vcmp.ne.s32.totalorder %v482, 0
      %vm533 = vcmp.ne.s32.totalorder %v489, 0
      %vm534 = vcmp.ne.s32.totalorder %v496, 0
      %vm535 = vcmp.ne.s32.totalorder %v503, 0
      %vm536 = vcmp.ne.s32.totalorder %v510, 0
      %vm537 = vcmp.ne.s32.totalorder %v517, 0
      %vm538 = vcmp.lt.s32.totalorder %v384, 0
      %vm539 = vcmp.lt.s32.totalorder %v391, 0
      %vm540 = vcmp.lt.s32.totalorder %v398, 0
      %vm541 = vcmp.lt.s32.totalorder %v405, 0
      %vm542 = vcmp.lt.s32.totalorder %v412, 0
      %vm543 = vcmp.lt.s32.totalorder %v419, 0
      %vm544 = vcmp.lt.s32.totalorder %v426, 0
      %vm545 = vcmp.lt.s32.totalorder %v433, 0
      %vm546 = vcmp.lt.s32.totalorder %v440, 0
      %vm547 = vcmp.lt.s32.totalorder %v447, 0
      %vm548 = vcmp.lt.s32.totalorder %v454, 0
      %vm549 = vcmp.lt.s32.totalorder %v461, 0
      %vm550 = vcmp.lt.s32.totalorder %v468, 0
      %vm551 = vcmp.lt.s32.totalorder %v475, 0
      %vm552 = vcmp.lt.s32.totalorder %v482, 0
      %vm553 = vcmp.lt.s32.totalorder %v489, 0
      %vm554 = vcmp.lt.s32.totalorder %v496, 0
      %vm555 = vcmp.lt.s32.totalorder %v503, 0
      %vm556 = vcmp.lt.s32.totalorder %v510, 0
      %vm557 = vcmp.lt.s32.totalorder %v517, 0
      %vm558 = vmand %vm538, %vm518
      %vm559 = vmand %vm539, %vm519
      %vm560 = vmand %vm540, %vm520
      %vm561 = vmand %vm541, %vm521
      %vm562 = vmand %vm542, %vm522
      %vm563 = vmand %vm543, %vm523
      %vm564 = vmand %vm544, %vm524
      %vm565 = vmand %vm545, %vm525
      %vm566 = vmand %vm546, %vm526
      %vm567 = vmand %vm547, %vm527
      %vm568 = vmand %vm548, %vm528
      %vm569 = vmand %vm549, %vm529
      %vm570 = vmand %vm550, %vm530
      %vm571 = vmand %vm551, %vm531
      %vm572 = vmand %vm552, %vm532
      %vm573 = vmand %vm553, %vm533
      %vm574 = vmand %vm554, %vm534
      %vm575 = vmand %vm555, %vm535
      %vm576 = vmand %vm556, %vm536
      %vm577 = vmand %vm557, %vm537
      %v578 = vadd.s32 %v384, 16
      %v579 = vadd.s32 %v391, 16
      %v580 = vadd.s32 %v398, 16
      %v581 = vadd.s32 %v405, 16
      %v582 = vadd.s32 %v412, 16
      %v583 = vadd.s32 %v419, 16
      %v584 = vadd.s32 %v426, 16
      %v585 = vadd.s32 %v433, 16
      %v586 = vadd.s32 %v440, 16
      %v587 = vadd.s32 %v447, 16
      %v588 = vadd.s32 %v454, 16
      %v589 = vadd.s32 %v461, 16
      %v590 = vadd.s32 %v468, 16
      %v591 = vadd.s32 %v475, 16
      %v592 = vadd.s32 %v482, 16
      %v593 = vadd.s32 %v489, 16
      %v594 = vadd.s32 %v496, 16
      %v595 = vadd.s32 %v503, 16
      %v596 = vadd.s32 %v510, 16
      %v597 = vadd.s32 %v517, 16
      %v598 = vsel %vm558, %v578, %v384
      %v599 = vsel %vm559, %v579, %v391
      %v600 = vsel %vm560, %v580, %v398
      %v601 = vsel %vm561, %v581, %v405
      %v602 = vsel %vm562, %v582, %v412
      %v603 = vsel %vm563, %v583, %v419
      %v604 = vsel %vm564, %v584, %v426
      %v605 = vsel %vm565, %v585, %v433
      %v606 = vsel %vm566, %v586, %v440
      %v607 = vsel %vm567, %v587, %v447
      %v608 = vsel %vm568, %v588, %v454
      %v609 = vsel %vm569, %v589, %v461
      %v610 = vsel %vm570, %v590, %v468
      %v611 = vsel %vm571, %v591, %v475
      %v612 = vsel %vm572, %v592, %v482
      %v613 = vsel %vm573, %v593, %v489
      %v614 = vsel %vm574, %v594, %v496
      %v615 = vsel %vm575, %v595, %v503
      %v616 = vsel %vm576, %v596, %v510
      %v617 = vsel %vm577, %v597, %v517
      %vm618 = vcmp.ne.s32.totalorder %v598, 0
      %vm619 = vcmp.ne.s32.totalorder %v599, 0
      %vm620 = vcmp.ne.s32.totalorder %v600, 0
      %vm621 = vcmp.ne.s32.totalorder %v601, 0
      %vm622 = vcmp.ne.s32.totalorder %v602, 0
      %vm623 = vcmp.ne.s32.totalorder %v603, 0
      %vm624 = vcmp.ne.s32.totalorder %v604, 0
      %vm625 = vcmp.ne.s32.totalorder %v605, 0
      %vm626 = vcmp.ne.s32.totalorder %v606, 0
      %vm627 = vcmp.ne.s32.totalorder %v607, 0
      %vm628 = vcmp.ne.s32.totalorder %v608, 0
      %vm629 = vcmp.ne.s32.totalorder %v609, 0
      %vm630 = vcmp.ne.s32.totalorder %v610, 0
      %vm631 = vcmp.ne.s32.totalorder %v611, 0
      %vm632 = vcmp.ne.s32.totalorder %v612, 0
      %vm633 = vcmp.ne.s32.totalorder %v613, 0
      %vm634 = vcmp.ne.s32.totalorder %v614, 0
      %vm635 = vcmp.ne.s32.totalorder %v615, 0
      %vm636 = vcmp.ne.s32.totalorder %v616, 0
      %vm637 = vcmp.ne.s32.totalorder %v617, 0
      %v638 = vsel %vm618, 1, 0
      %v639 = vsel %vm619, 1, 0
      %v640 = vsel %vm620, 1, 0
      %v641 = vsel %vm621, 1, 0
      %v642 = vsel %vm622, 1, 0
      %v643 = vsel %vm623, 1, 0
      %v644 = vsel %vm624, 1, 0
      %v645 = vsel %vm625, 1, 0
      %v646 = vsel %vm626, 1, 0
      %v647 = vsel %vm627, 1, 0
      %v648 = vsel %vm628, 1, 0
      %v649 = vsel %vm629, 1, 0
      %v650 = vsel %vm630, 1, 0
      %v651 = vsel %vm631, 1, 0
      %v652 = vsel %vm632, 1, 0
      %v653 = vsel %vm633, 1, 0
      %v654 = vsel %vm634, 1, 0
      %v655 = vsel %vm635, 1, 0
      %v656 = vsel %vm636, 1, 0
      %v657 = vsel %vm637, 1, 0
      %v658 = vcvt.s32.f32 %v638
      %v659 = vcvt.s32.f32 %v639
      %v660 = vcvt.s32.f32 %v640
      %v661 = vcvt.s32.f32 %v641
      %v662 = vcvt.s32.f32 %v642
      %v663 = vcvt.s32.f32 %v643
      %v664 = vcvt.s32.f32 %v644
      %v665 = vcvt.s32.f32 %v645
      %v666 = vcvt.s32.f32 %v646
      %v667 = vcvt.s32.f32 %v647
      %v668 = vcvt.s32.f32 %v648
      %v669 = vcvt.s32.f32 %v649
      %v670 = vcvt.s32.f32 %v650
      %v671 = vcvt.s32.f32 %v651
      %v672 = vcvt.s32.f32 %v652
      %v673 = vcvt.s32.f32 %v653
      %v674 = vcvt.s32.f32 %v654
      %v675 = vcvt.s32.f32 %v655
      %v676 = vcvt.s32.f32 %v656
      %v677 = vcvt.s32.f32 %v657
      %vm678 = vcmp.ne.s32.totalorder %v598, 15
      %vm679 = vcmp.ne.s32.totalorder %v599, 15
      %vm680 = vcmp.ne.s32.totalorder %v600, 15
      %vm681 = vcmp.ne.s32.totalorder %v601, 15
      %vm682 = vcmp.ne.s32.totalorder %v602, 15
      %vm683 = vcmp.ne.s32.totalorder %v603, 15
      %vm684 = vcmp.ne.s32.totalorder %v604, 15
      %vm685 = vcmp.ne.s32.totalorder %v605, 15
      %vm686 = vcmp.ne.s32.totalorder %v606, 15
      %vm687 = vcmp.ne.s32.totalorder %v607, 15
      %vm688 = vcmp.ne.s32.totalorder %v608, 15
      %vm689 = vcmp.ne.s32.totalorder %v609, 15
      %vm690 = vcmp.ne.s32.totalorder %v610, 15
      %vm691 = vcmp.ne.s32.totalorder %v611, 15
      %vm692 = vcmp.ne.s32.totalorder %v612, 15
      %vm693 = vcmp.ne.s32.totalorder %v613, 15
      %vm694 = vcmp.ne.s32.totalorder %v614, 15
      %vm695 = vcmp.ne.s32.totalorder %v615, 15
      %vm696 = vcmp.ne.s32.totalorder %v616, 15
      %vm697 = vcmp.ne.s32.totalorder %v617, 15
      %v698 = vsel %vm678, 1, 0
      %v699 = vsel %vm679, 1, 0
      %v700 = vsel %vm680, 1, 0
      %v701 = vsel %vm681, 1, 0
      %v702 = vsel %vm682, 1, 0
      %v703 = vsel %vm683, 1, 0
      %v704 = vsel %vm684, 1, 0
      %v705 = vsel %vm685, 1, 0
      %v706 = vsel %vm686, 1, 0
      %v707 = vsel %vm687, 1, 0
      %v708 = vsel %vm688, 1, 0
      %v709 = vsel %vm689, 1, 0
      %v710 = vsel %vm690, 1, 0
      %v711 = vsel %vm691, 1, 0
      %v712 = vsel %vm692, 1, 0
      %v713 = vsel %vm693, 1, 0
      %v714 = vsel %vm694, 1, 0
      %v715 = vsel %vm695, 1, 0
      %v716 = vsel %vm696, 1, 0
      %v717 = vsel %vm697, 1, 0
      %v718 = vcvt.s32.f32 %v698
      %v719 = vcvt.s32.f32 %v699
      %v720 = vcvt.s32.f32 %v700
      %v721 = vcvt.s32.f32 %v701
      %v722 = vcvt.s32.f32 %v702
      %v723 = vcvt.s32.f32 %v703
      %v724 = vcvt.s32.f32 %v704
      %v725 = vcvt.s32.f32 %v705
      %v726 = vcvt.s32.f32 %v706
      %v727 = vcvt.s32.f32 %v707
      %v728 = vcvt.s32.f32 %v708
      %v729 = vcvt.s32.f32 %v709
      %v730 = vcvt.s32.f32 %v710
      %v731 = vcvt.s32.f32 %v711
      %v732 = vcvt.s32.f32 %v712
      %v733 = vcvt.s32.f32 %v713
      %v734 = vcvt.s32.f32 %v714
      %v735 = vcvt.s32.f32 %v715
      %v736 = vcvt.s32.f32 %v716
      %v737 = vcvt.s32.f32 %v717
      %v738 = vrot.slane %v337, 7
      %v739 = vrot.slane %v338, 7
      %v740 = vrot.slane %v339, 7
      %v741 = vrot.slane %v340, 7
      %v742 = vrot.slane %v341, 7
      %v743 = vrot.slane %v342, 7
      %v744 = vrot.slane %v343, 7
      %v745 = vrot.slane %v344, 7
      %v746 = vrot.slane %v345, 7
      %v747 = vrot.slane %v346, 7
      %v748 = vrot.slane %v347, 7
      %v749 = vrot.slane %v348, 7
      %v750 = vrot.slane %v349, 7
      %v751 = vrot.slane %v350, 7
      %v752 = vrot.slane %v351, 7
      %v753 = vrot.slane %v352, 7
      %v754 = vrot.slane %v353, 7
      %v755 = vrot.slane %v354, 7
      %v756 = vrot.slane %v355, 7
      %v757 = vrot.slane %v356, 7
      %vm758 = vcmp.lt.s32.totalorder %v358, 1
      %v759 = vsel %vm758, %v756, %v757
      %v760 = vsel %vm758, %v755, %v756
      %v761 = vsel %vm758, %v754, %v755
      %v762 = vsel %vm758, %v753, %v754
      %v763 = vsel %vm758, %v752, %v753
      %v764 = vsel %vm758, %v751, %v752
      %v765 = vsel %vm758, %v750, %v751
      %v766 = vsel %vm758, %v749, %v750
      %v767 = vsel %vm758, %v748, %v749
      %v768 = vsel %vm758, %v747, %v748
      %v769 = vsel %vm758, %v746, %v747
      %v770 = vsel %vm758, %v745, %v746
      %v771 = vsel %vm758, %v744, %v745
      %v772 = vsel %vm758, %v743, %v744
      %v773 = vsel %vm758, %v742, %v743
      %v774 = vsel %vm758, %v741, %v742
      %v775 = vsel %vm758, %v740, %v741
      %v776 = vsel %vm758, %v739, %v740
      %v777 = vsel %vm758, %v738, %v739
      %v778 = vsel %vm758, %v757, %v738
      %v779 = vmul.f32 %v778, %v658
      %v780 = vmul.f32 %v777, %v659
      %v781 = vmul.f32 %v776, %v660
      %v782 = vmul.f32 %v775, %v661
      %v783 = vmul.f32 %v774, %v662
      %v784 = vmul.f32 %v773, %v663
      %v785 = vmul.f32 %v772, %v664
      %v786 = vmul.f32 %v771, %v665
      %v787 = vmul.f32 %v770, %v666
      %v788 = vmul.f32 %v769, %v667
      %v789 = vmul.f32 %v768, %v668
      %v790 = vmul.f32 %v767, %v669
      %v791 = vmul.f32 %v766, %v670
      %v792 = vmul.f32 %v765, %v671
      %v793 = vmul.f32 %v764, %v672
      %v794 = vmul.f32 %v763, %v673
      %v795 = vmul.f32 %v762, %v674
      %v796 = vmul.f32 %v761, %v675
      %v797 = vmul.f32 %v760, %v676
      %v798 = vmul.f32 %v759, %v677
      %v799 = vrot.slane %v337, 1
      %v800 = vrot.slane %v338, 1
      %v801 = vrot.slane %v339, 1
      %v802 = vrot.slane %v340, 1
      %v803 = vrot.slane %v341, 1
      %v804 = vrot.slane %v342, 1
      %v805 = vrot.slane %v343, 1
      %v806 = vrot.slane %v344, 1
      %v807 = vrot.slane %v345, 1
      %v808 = vrot.slane %v346, 1
      %v809 = vrot.slane %v347, 1
      %v810 = vrot.slane %v348, 1
      %v811 = vrot.slane %v349, 1
      %v812 = vrot.slane %v350, 1
      %v813 = vrot.slane %v351, 1
      %v814 = vrot.slane %v352, 1
      %v815 = vrot.slane %v353, 1
      %v816 = vrot.slane %v354, 1
      %v817 = vrot.slane %v355, 1
      %v818 = vrot.slane %v356, 1
      %vm819 = vcmp.lt.s32.totalorder %v358, 7
      %v820 = vsel %vm819, %v817, %v818
      %v821 = vsel %vm819, %v816, %v817
      %v822 = vsel %vm819, %v815, %v816
      %v823 = vsel %vm819, %v814, %v815
      %v824 = vsel %vm819, %v813, %v814
      %v825 = vsel %vm819, %v812, %v813
      %v826 = vsel %vm819, %v811, %v812
      %v827 = vsel %vm819, %v810, %v811
      %v828 = vsel %vm819, %v809, %v810
      %v829 = vsel %vm819, %v808, %v809
      %v830 = vsel %vm819, %v807, %v808
      %v831 = vsel %vm819, %v806, %v807
      %v832 = vsel %vm819, %v805, %v806
      %v833 = vsel %vm819, %v804, %v805
      %v834 = vsel %vm819, %v803, %v804
      %v835 = vsel %vm819, %v802, %v803
      %v836 = vsel %vm819, %v801, %v802
      %v837 = vsel %vm819, %v800, %v801
      %v838 = vsel %vm819, %v799, %v800
      %v839 = vsel %vm819, %v818, %v799
      %v840 = vmul.f32 %v838, %v718
      %v841 = vmul.f32 %v837, %v719
      %v842 = vmul.f32 %v836, %v720
      %v843 = vmul.f32 %v835, %v721
      %v844 = vmul.f32 %v834, %v722
      %v845 = vmul.f32 %v833, %v723
      %v846 = vmul.f32 %v832, %v724
      %v847 = vmul.f32 %v831, %v725
      %v848 = vmul.f32 %v830, %v726
      %v849 = vmul.f32 %v829, %v727
      %v850 = vmul.f32 %v828, %v728
      %v851 = vmul.f32 %v827, %v729
      %v852 = vmul.f32 %v826, %v730
      %v853 = vmul.f32 %v825, %v731
      %v854 = vmul.f32 %v824, %v732
      %v855 = vmul.f32 %v823, %v733
      %v856 = vmul.f32 %v822, %v734
      %v857 = vmul.f32 %v821, %v735
      %v858 = vmul.f32 %v820, %v736
      %v859 = vmul.f32 %v839, %v737
      %876 = vrot.lane.b32.xlu0 %v337, 4
      %v877 = vpop.permute.xlu0 %876
      %878 = vrot.lane.b32.xlu0 %v338, 4
      %v879 = vpop.permute.xlu0 %878
      %880 = vrot.lane.b32.xlu0 %v339, 4
      %v881 = vpop.permute.xlu0 %880
      %882 = vrot.lane.b32.xlu0 %v340, 4
      %v883 = vpop.permute.xlu0 %882
      %884 = vrot.lane.b32.xlu0 %v341, 4
      %v885 = vpop.permute.xlu0 %884
      %886 = vrot.lane.b32.xlu0 %v342, 4
      %v887 = vpop.permute.xlu0 %886
      %888 = vrot.lane.b32.xlu0 %v343, 4
      %v889 = vpop.permute.xlu0 %888
      %890 = vrot.lane.b32.xlu0 %v344, 4
      %v891 = vpop.permute.xlu0 %890
      %892 = vrot.lane.b32.xlu0 %v345, 4
      %v893 = vpop.permute.xlu0 %892
      %894 = vrot.lane.b32.xlu0 %v346, 4
      %v895 = vpop.permute.xlu0 %894
      %896 = vrot.lane.b32.xlu0 %v347, 4
      %v897 = vpop.permute.xlu0 %896
      %898 = vrot.lane.b32.xlu0 %v348, 4
      %v899 = vpop.permute.xlu0 %898
      %900 = vrot.lane.b32.xlu0 %v349, 4
      %v901 = vpop.permute.xlu0 %900
      %902 = vrot.lane.b32.xlu0 %v350, 4
      %v903 = vpop.permute.xlu0 %902
      %904 = vrot.lane.b32.xlu0 %v351, 4
      %v905 = vpop.permute.xlu0 %904
      %906 = vrot.lane.b32.xlu0 %v352, 4
      %v907 = vpop.permute.xlu0 %906
      %940 = vrot.lane.b32.xlu0 %v840, 8
      %v941 = vpop.permute.xlu0 %940
      %942 = vrot.lane.b32.xlu0 %v841, 8
      %v943 = vpop.permute.xlu0 %942
      %944 = vrot.lane.b32.xlu0 %v842, 8
      %v945 = vpop.permute.xlu0 %944
      %946 = vrot.lane.b32.xlu0 %v843, 8
      %v947 = vpop.permute.xlu0 %946
      %948 = vrot.lane.b32.xlu0 %v844, 8
      %v949 = vpop.permute.xlu0 %948
      %950 = vrot.lane.b32.xlu0 %v845, 8
      %v951 = vpop.permute.xlu0 %950
      %952 = vrot.lane.b32.xlu0 %v846, 8
      %v953 = vpop.permute.xlu0 %952
      %954 = vrot.lane.b32.xlu0 %v847, 8
      %v955 = vpop.permute.xlu0 %954
      %956 = vrot.lane.b32.xlu0 %v848, 8
      %v957 = vpop.permute.xlu0 %956
      %958 = vrot.lane.b32.xlu0 %v849, 8
      %v959 = vpop.permute.xlu0 %958
      %960 = vrot.lane.b32.xlu0 %v850, 8
      %v961 = vpop.permute.xlu0 %960
      %962 = vrot.lane.b32.xlu0 %v851, 8
      %v963 = vpop.permute.xlu0 %962
      %964 = vrot.lane.b32.xlu0 %v852, 8
      %v965 = vpop.permute.xlu0 %964
      %966 = vrot.lane.b32.xlu0 %v853, 8
      %v967 = vpop.permute.xlu0 %966
      %968 = vrot.lane.b32.xlu0 %v854, 8
      %v969 = vpop.permute.xlu0 %968
      %970 = vrot.lane.b32.xlu0 %v855, 8
      %v971 = vpop.permute.xlu0 %970
      %1004 = vrot.lane.b32.xlu0 %v781, 12
      %v1005 = vpop.permute.xlu0 %1004
      %1006 = vrot.lane.b32.xlu0 %v782, 12
      %v1007 = vpop.permute.xlu0 %1006
      %1008 = vrot.lane.b32.xlu0 %v783, 12
      %v1009 = vpop.permute.xlu0 %1008
      %1010 = vrot.lane.b32.xlu0 %v784, 12
      %v1011 = vpop.permute.xlu0 %1010
      %1012 = vrot.lane.b32.xlu0 %v785, 12
      %v1013 = vpop.permute.xlu0 %1012
      %1014 = vrot.lane.b32.xlu0 %v786, 12
      %v1015 = vpop.permute.xlu0 %1014
      %1016 = vrot.lane.b32.xlu0 %v787, 12
      %v1017 = vpop.permute.xlu0 %1016
      %1018 = vrot.lane.b32.xlu0 %v788, 12
      %v1019 = vpop.permute.xlu0 %1018
      %1020 = vrot.lane.b32.xlu0 %v789, 12
      %v1021 = vpop.permute.xlu0 %1020
      %1022 = vrot.lane.b32.xlu0 %v790, 12
      %v1023 = vpop.permute.xlu0 %1022
      %1024 = vrot.lane.b32.xlu0 %v791, 12
      %v1025 = vpop.permute.xlu0 %1024
      %1026 = vrot.lane.b32.xlu0 %v792, 12
      %v1027 = vpop.permute.xlu0 %1026
      %1028 = vrot.lane.b32.xlu0 %v793, 12
      %v1029 = vpop.permute.xlu0 %1028
      %1030 = vrot.lane.b32.xlu0 %v794, 12
      %v1031 = vpop.permute.xlu0 %1030
      %1032 = vrot.lane.b32.xlu0 %v795, 12
      %v1033 = vpop.permute.xlu0 %1032
      %1034 = vrot.lane.b32.xlu0 %v796, 12
      %v1035 = vpop.permute.xlu0 %1034
      %1054 = vrot.lane.b32.xlu0 %v339, 16
      %v1055 = vpop.permute.xlu0 %1054
      %1056 = vrot.lane.b32.xlu0 %v340, 16
      %v1057 = vpop.permute.xlu0 %1056
      %1058 = vrot.lane.b32.xlu0 %v341, 16
      %v1059 = vpop.permute.xlu0 %1058
      %1060 = vrot.lane.b32.xlu0 %v342, 16
      %v1061 = vpop.permute.xlu0 %1060
      %1062 = vrot.lane.b32.xlu0 %v343, 16
      %v1063 = vpop.permute.xlu0 %1062
      %1064 = vrot.lane.b32.xlu0 %v344, 16
      %v1065 = vpop.permute.xlu0 %1064
      %1066 = vrot.lane.b32.xlu0 %v345, 16
      %v1067 = vpop.permute.xlu0 %1066
      %1068 = vrot.lane.b32.xlu0 %v346, 16
      %v1069 = vpop.permute.xlu0 %1068
      %1070 = vrot.lane.b32.xlu0 %v347, 16
      %v1071 = vpop.permute.xlu0 %1070
      %1072 = vrot.lane.b32.xlu0 %v348, 16
      %v1073 = vpop.permute.xlu0 %1072
      %1074 = vrot.lane.b32.xlu0 %v349, 16
      %v1075 = vpop.permute.xlu0 %1074
      %1076 = vrot.lane.b32.xlu0 %v350, 16
      %v1077 = vpop.permute.xlu0 %1076
      %1078 = vrot.lane.b32.xlu0 %v351, 16
      %v1079 = vpop.permute.xlu0 %1078
      %1080 = vrot.lane.b32.xlu0 %v352, 16
      %v1081 = vpop.permute.xlu0 %1080
      %1082 = vrot.lane.b32.xlu0 %v353, 16
      %v1083 = vpop.permute.xlu0 %1082
      %1084 = vrot.lane.b32.xlu0 %v354, 16
      %v1085 = vpop.permute.xlu0 %1084
      %1104 = vrot.lane.b32.xlu0 %v842, 20
      %v1105 = vpop.permute.xlu0 %1104
      %1106 = vrot.lane.b32.xlu0 %v843, 20
      %v1107 = vpop.permute.xlu0 %1106
      %1108 = vrot.lane.b32.xlu0 %v844, 20
      %v1109 = vpop.permute.xlu0 %1108
      %1110 = vrot.lane.b32.xlu0 %v845, 20
      %v1111 = vpop.permute.xlu0 %1110
      %1112 = vrot.lane.b32.xlu0 %v846, 20
      %v1113 = vpop.permute.xlu0 %1112
      %1114 = vrot.lane.b32.xlu0 %v847, 20
      %v1115 = vpop.permute.xlu0 %1114
      %1116 = vrot.lane.b32.xlu0 %v848, 20
      %v1117 = vpop.permute.xlu0 %1116
      %1118 = vrot.lane.b32.xlu0 %v849, 20
      %v1119 = vpop.permute.xlu0 %1118
      %1120 = vrot.lane.b32.xlu0 %v850, 20
      %v1121 = vpop.permute.xlu0 %1120
      %1122 = vrot.lane.b32.xlu0 %v851, 20
      %v1123 = vpop.permute.xlu0 %1122
      %1124 = vrot.lane.b32.xlu0 %v852, 20
      %v1125 = vpop.permute.xlu0 %1124
      %1126 = vrot.lane.b32.xlu0 %v853, 20
      %v1127 = vpop.permute.xlu0 %1126
      %1128 = vrot.lane.b32.xlu0 %v854, 20
      %v1129 = vpop.permute.xlu0 %1128
      %1130 = vrot.lane.b32.xlu0 %v855, 20
      %v1131 = vpop.permute.xlu0 %1130
      %1132 = vrot.lane.b32.xlu0 %v856, 20
      %v1133 = vpop.permute.xlu0 %1132
      %1134 = vrot.lane.b32.xlu0 %v857, 20
      %v1135 = vpop.permute.xlu0 %1134
      %1154 = vrot.lane.b32.xlu0 %v783, 24
      %v1155 = vpop.permute.xlu0 %1154
      %1156 = vrot.lane.b32.xlu0 %v784, 24
      %v1157 = vpop.permute.xlu0 %1156
      %1158 = vrot.lane.b32.xlu0 %v785, 24
      %v1159 = vpop.permute.xlu0 %1158
      %1160 = vrot.lane.b32.xlu0 %v786, 24
      %v1161 = vpop.permute.xlu0 %1160
      %1162 = vrot.lane.b32.xlu0 %v787, 24
      %v1163 = vpop.permute.xlu0 %1162
      %1164 = vrot.lane.b32.xlu0 %v788, 24
      %v1165 = vpop.permute.xlu0 %1164
      %1166 = vrot.lane.b32.xlu0 %v789, 24
      %v1167 = vpop.permute.xlu0 %1166
      %1168 = vrot.lane.b32.xlu0 %v790, 24
      %v1169 = vpop.permute.xlu0 %1168
      %1170 = vrot.lane.b32.xlu0 %v791, 24
      %v1171 = vpop.permute.xlu0 %1170
      %1172 = vrot.lane.b32.xlu0 %v792, 24
      %v1173 = vpop.permute.xlu0 %1172
      %1174 = vrot.lane.b32.xlu0 %v793, 24
      %v1175 = vpop.permute.xlu0 %1174
      %1176 = vrot.lane.b32.xlu0 %v794, 24
      %v1177 = vpop.permute.xlu0 %1176
      %1178 = vrot.lane.b32.xlu0 %v795, 24
      %v1179 = vpop.permute.xlu0 %1178
      %1180 = vrot.lane.b32.xlu0 %v796, 24
      %v1181 = vpop.permute.xlu0 %1180
      %1182 = vrot.lane.b32.xlu0 %v797, 24
      %v1183 = vpop.permute.xlu0 %1182
      %1184 = vrot.lane.b32.xlu0 %v798, 24
      %v1185 = vpop.permute.xlu0 %1184
      %1204 = vrot.lane.b32.xlu0 %v341, 28
      %v1205 = vpop.permute.xlu0 %1204
      %1206 = vrot.lane.b32.xlu0 %v342, 28
      %v1207 = vpop.permute.xlu0 %1206
      %1208 = vrot.lane.b32.xlu0 %v343, 28
      %v1209 = vpop.permute.xlu0 %1208
      %1210 = vrot.lane.b32.xlu0 %v344, 28
      %v1211 = vpop.permute.xlu0 %1210
      %1212 = vrot.lane.b32.xlu0 %v345, 28
      %v1213 = vpop.permute.xlu0 %1212
      %1214 = vrot.lane.b32.xlu0 %v346, 28
      %v1215 = vpop.permute.xlu0 %1214
      %1216 = vrot.lane.b32.xlu0 %v347, 28
      %v1217 = vpop.permute.xlu0 %1216
      %1218 = vrot.lane.b32.xlu0 %v348, 28
      %v1219 = vpop.permute.xlu0 %1218
      %1220 = vrot.lane.b32.xlu0 %v349, 28
      %v1221 = vpop.permute.xlu0 %1220
      %1222 = vrot.lane.b32.xlu0 %v350, 28
      %v1223 = vpop.permute.xlu0 %1222
      %1224 = vrot.lane.b32.xlu0 %v351, 28
      %v1225 = vpop.permute.xlu0 %1224
      %1226 = vrot.lane.b32.xlu0 %v352, 28
      %v1227 = vpop.permute.xlu0 %1226
      %1228 = vrot.lane.b32.xlu0 %v353, 28
      %v1229 = vpop.permute.xlu0 %1228
      %1230 = vrot.lane.b32.xlu0 %v354, 28
      %v1231 = vpop.permute.xlu0 %1230
      %1232 = vrot.lane.b32.xlu0 %v355, 28
      %v1233 = vpop.permute.xlu0 %1232
      %1234 = vrot.lane.b32.xlu0 %v356, 28
      %v1235 = vpop.permute.xlu0 %1234
      %1254 = vrot.lane.b32.xlu0 %v844, 32
      %v1255 = vpop.permute.xlu0 %1254
      %1256 = vrot.lane.b32.xlu0 %v845, 32
      %v1257 = vpop.permute.xlu0 %1256
      %1258 = vrot.lane.b32.xlu0 %v846, 32
      %v1259 = vpop.permute.xlu0 %1258
      %1260 = vrot.lane.b32.xlu0 %v847, 32
      %v1261 = vpop.permute.xlu0 %1260
      %1262 = vrot.lane.b32.xlu0 %v848, 32
      %v1263 = vpop.permute.xlu0 %1262
      %1264 = vrot.lane.b32.xlu0 %v849, 32
      %v1265 = vpop.permute.xlu0 %1264
      %1266 = vrot.lane.b32.xlu0 %v850, 32
      %v1267 = vpop.permute.xlu0 %1266
      %1268 = vrot.lane.b32.xlu0 %v851, 32
      %v1269 = vpop.permute.xlu0 %1268
      %1270 = vrot.lane.b32.xlu0 %v852, 32
      %v1271 = vpop.permute.xlu0 %1270
      %1272 = vrot.lane.b32.xlu0 %v853, 32
      %v1273 = vpop.permute.xlu0 %1272
      %1274 = vrot.lane.b32.xlu0 %v854, 32
      %v1275 = vpop.permute.xlu0 %1274
      %1276 = vrot.lane.b32.xlu0 %v855, 32
      %v1277 = vpop.permute.xlu0 %1276
      %1278 = vrot.lane.b32.xlu0 %v856, 32
      %v1279 = vpop.permute.xlu0 %1278
      %1280 = vrot.lane.b32.xlu0 %v857, 32
      %v1281 = vpop.permute.xlu0 %1280
      %1282 = vrot.lane.b32.xlu0 %v858, 32
      %v1283 = vpop.permute.xlu0 %1282
      %1284 = vrot.lane.b32.xlu0 %v859, 32
      %v1285 = vpop.permute.xlu0 %1284
      %vm1302 = vcmask 31744
      %v1303 = vsel %vm1302, %v779, %v877
      %v1304 = vsel %vm1302, %v780, %v879
      %v1305 = vsel %vm1302, %v781, %v881
      %v1306 = vsel %vm1302, %v782, %v883
      %v1307 = vsel %vm1302, %v783, %v885
      %v1308 = vsel %vm1302, %v784, %v887
      %v1309 = vsel %vm1302, %v785, %v889
      %v1310 = vsel %vm1302, %v786, %v891
      %v1311 = vsel %vm1302, %v787, %v893
      %v1312 = vsel %vm1302, %v788, %v895
      %v1313 = vsel %vm1302, %v789, %v897
      %v1314 = vsel %vm1302, %v790, %v899
      %v1315 = vsel %vm1302, %v791, %v901
      %v1316 = vsel %vm1302, %v792, %v903
      %v1317 = vsel %vm1302, %v793, %v905
      %v1318 = vsel %vm1302, %v794, %v907
      %vm1319 = vcmask 64512
      %v1320 = vsel %vm1319, %v1303, %v941
      %v1321 = vsel %vm1319, %v1304, %v943
      %v1322 = vsel %vm1319, %v1305, %v945
      %v1323 = vsel %vm1319, %v1306, %v947
      %v1324 = vsel %vm1319, %v1307, %v949
      %v1325 = vsel %vm1319, %v1308, %v951
      %v1326 = vsel %vm1319, %v1309, %v953
      %v1327 = vsel %vm1319, %v1310, %v955
      %v1328 = vsel %vm1319, %v1311, %v957
      %v1329 = vsel %vm1319, %v1312, %v959
      %v1330 = vsel %vm1319, %v1313, %v961
      %v1331 = vsel %vm1319, %v1314, %v963
      %v1332 = vsel %vm1319, %v1315, %v965
      %v1333 = vsel %vm1319, %v1316, %v967
      %v1334 = vsel %vm1319, %v1317, %v969
      %v1335 = vsel %vm1319, %v1318, %v971
      %vm1336 = vcmask 97280
      %v1337 = vsel %vm1336, %v1320, %v1005
      %v1338 = vsel %vm1336, %v1321, %v1007
      %v1339 = vsel %vm1336, %v1322, %v1009
      %v1340 = vsel %vm1336, %v1323, %v1011
      %v1341 = vsel %vm1336, %v1324, %v1013
      %v1342 = vsel %vm1336, %v1325, %v1015
      %v1343 = vsel %vm1336, %v1326, %v1017
      %v1344 = vsel %vm1336, %v1327, %v1019
      %v1345 = vsel %vm1336, %v1328, %v1021
      %v1346 = vsel %vm1336, %v1329, %v1023
      %v1347 = vsel %vm1336, %v1330, %v1025
      %v1348 = vsel %vm1336, %v1331, %v1027
      %v1349 = vsel %vm1336, %v1332, %v1029
      %v1350 = vsel %vm1336, %v1333, %v1031
      %v1351 = vsel %vm1336, %v1334, %v1033
      %v1352 = vsel %vm1336, %v1335, %v1035
      %vm1353 = vcmask 130048
      %v1354 = vsel %vm1353, %v1337, %v1055
      %v1355 = vsel %vm1353, %v1338, %v1057
      %v1356 = vsel %vm1353, %v1339, %v1059
      %v1357 = vsel %vm1353, %v1340, %v1061
      %v1358 = vsel %vm1353, %v1341, %v1063
      %v1359 = vsel %vm1353, %v1342, %v1065
      %v1360 = vsel %vm1353, %v1343, %v1067
      %v1361 = vsel %vm1353, %v1344, %v1069
      %v1362 = vsel %vm1353, %v1345, %v1071
      %v1363 = vsel %vm1353, %v1346, %v1073
      %v1364 = vsel %vm1353, %v1347, %v1075
      %v1365 = vsel %vm1353, %v1348, %v1077
      %v1366 = vsel %vm1353, %v1349, %v1079
      %v1367 = vsel %vm1353, %v1350, %v1081
      %v1368 = vsel %vm1353, %v1351, %v1083
      %v1369 = vsel %vm1353, %v1352, %v1085
      %vm1370 = vcmask 162816
      %v1371 = vsel %vm1370, %v1354, %v1105
      %v1372 = vsel %vm1370, %v1355, %v1107
      %v1373 = vsel %vm1370, %v1356, %v1109
      %v1374 = vsel %vm1370, %v1357, %v1111
      %v1375 = vsel %vm1370, %v1358, %v1113
      %v1376 = vsel %vm1370, %v1359, %v1115
      %v1377 = vsel %vm1370, %v1360, %v1117
      %v1378 = vsel %vm1370, %v1361, %v1119
      %v1379 = vsel %vm1370, %v1362, %v1121
      %v1380 = vsel %vm1370, %v1363, %v1123
      %v1381 = vsel %vm1370, %v1364, %v1125
      %v1382 = vsel %vm1370, %v1365, %v1127
      %v1383 = vsel %vm1370, %v1366, %v1129
      %v1384 = vsel %vm1370, %v1367, %v1131
      %v1385 = vsel %vm1370, %v1368, %v1133
      %v1386 = vsel %vm1370, %v1369, %v1135
      %vm1387 = vcmask 195584
      %v1388 = vsel %vm1387, %v1371, %v1155
      %v1389 = vsel %vm1387, %v1372, %v1157
      %v1390 = vsel %vm1387, %v1373, %v1159
      %v1391 = vsel %vm1387, %v1374, %v1161
      %v1392 = vsel %vm1387, %v1375, %v1163
      %v1393 = vsel %vm1387, %v1376, %v1165
      %v1394 = vsel %vm1387, %v1377, %v1167
      %v1395 = vsel %vm1387, %v1378, %v1169
      %v1396 = vsel %vm1387, %v1379, %v1171
      %v1397 = vsel %vm1387, %v1380, %v1173
      %v1398 = vsel %vm1387, %v1381, %v1175
      %v1399 = vsel %vm1387, %v1382, %v1177
      %v1400 = vsel %vm1387, %v1383, %v1179
      %v1401 = vsel %vm1387, %v1384, %v1181
      %v1402 = vsel %vm1387, %v1385, %v1183
      %v1403 = vsel %vm1387, %v1386, %v1185
      %vm1404 = vcmask 228352
      %v1405 = vsel %vm1404, %v1388, %v1205
      %v1406 = vsel %vm1404, %v1389, %v1207
      %v1407 = vsel %vm1404, %v1390, %v1209
      %v1408 = vsel %vm1404, %v1391, %v1211
      %v1409 = vsel %vm1404, %v1392, %v1213
      %v1410 = vsel %vm1404, %v1393, %v1215
      %v1411 = vsel %vm1404, %v1394, %v1217
      %v1412 = vsel %vm1404, %v1395, %v1219
      %v1413 = vsel %vm1404, %v1396, %v1221
      %v1414 = vsel %vm1404, %v1397, %v1223
      %v1415 = vsel %vm1404, %v1398, %v1225
      %v1416 = vsel %vm1404, %v1399, %v1227
      %v1417 = vsel %vm1404, %v1400, %v1229
      %v1418 = vsel %vm1404, %v1401, %v1231
      %v1419 = vsel %vm1404, %v1402, %v1233
      %v1420 = vsel %vm1404, %v1403, %v1235
      %vm1421 = vcmask 261120
      %v1422 = vsel %vm1421, %v1405, %v1255
      %v1423 = vsel %vm1421, %v1406, %v1257
      %v1424 = vsel %vm1421, %v1407, %v1259
      %v1425 = vsel %vm1421, %v1408, %v1261
      %v1426 = vsel %vm1421, %v1409, %v1263
      %v1427 = vsel %vm1421, %v1410, %v1265
      %v1428 = vsel %vm1421, %v1411, %v1267
      %v1429 = vsel %vm1421, %v1412, %v1269
      %v1430 = vsel %vm1421, %v1413, %v1271
      %v1431 = vsel %vm1421, %v1414, %v1273
      %v1432 = vsel %vm1421, %v1415, %v1275
      %v1433 = vsel %vm1421, %v1416, %v1277
      %v1434 = vsel %vm1421, %v1417, %v1279
      %v1435 = vsel %vm1421, %v1418, %v1281
      %v1436 = vsel %vm1421, %v1419, %v1283
      %v1437 = vsel %vm1421, %v1420, %v1285
      %v1438 = vld [vmem:[%s3] sm:$0xff]
      %v1439 = vld [vmem:[%s3 + $0x8] sm:$0xff]
      %v1440 = vld [vmem:[%s3 + $0x10] sm:$0xff]
      %v1441 = vld [vmem:[%s3 + $0x18] sm:$0xff]
      %v1442 = vld [vmem:[%s3 + $0x20] sm:$0xf]
      %v1443 = vld [vmem:[%s4] sm:$0x1]
      %v1445 = vlaneseq
      %v1446 = vshrl.u32 %v1445, 7
      %v1447 = vsub.s32 0, %v1446
      %v1448 = vrot.slane %v1443, %v1447
      %vm1450 = vcmask 293888
      %v1452 = vsel %vm1450, %v1422, 0
      %v1455 = vsel %vm1450, %v1423, 0
      %v1458 = vsel %vm1450, %v1424, 0
      %v1461 = vsel %vm1450, %v1425, 0
      %v1464 = vsel %vm1450, %v1426, 0
      %v1467 = vsel %vm1450, %v1427, 0
      %v1470 = vsel %vm1450, %v1428, 0
      %v1473 = vsel %vm1450, %v1429, 0
      %v1476 = vsel %vm1450, %v1430, 0
      %v1479 = vsel %vm1450, %v1431, 0
      %v1482 = vsel %vm1450, %v1432, 0
      %v1485 = vsel %vm1450, %v1433, 0
      %v1488 = vsel %vm1450, %v1434, 0
      %v1491 = vsel %vm1450, %v1435, 0
      %v1494 = vsel %vm1450, %v1436, 0
      %v1497 = vsel %vm1450, %v1437, 0
      %vm1499 = vcmask 1043456
      %v1501 = vsel %vm1499, %v1442, 0
      %1503 = vmatprep.subr.mxu0 0.0
      %1504 = vmatpush1.msra.mxu0 0.0
      %1505 = vmatprep.subr.mxu0 0.0
      %1506 = vmatpush1.msra.mxu0 0.0
      %1507 = vmatprep.subr.mxu0 0.0
      %1508 = vmatpush1.msra.mxu0 0.0
      %1509 = vmatprep.subr.mxu0 0.0
      %1510 = vmatpush1.msra.mxu0 0.0
      %1511 = vmatprep.subr.mxu0 0.0
      %1512 = vmatpush1.msra.mxu0 0.0
      %1513 = vmatprep.subr.mxu0 0.0
      %1514 = vmatpush1.msra.mxu0 0.0
      %1515 = vmatprep.subr.mxu0 0.0
      %1516 = vmatpush1.msra.mxu0 0.0
      %1517 = vmatprep.subr.mxu0 0.0
      %1518 = vmatpush1.msra.mxu0 0.0
      %1519 = vmatprep.subr.mxu0 0.0
      %1520 = vmatpush1.msra.mxu0 0.0
      %1521 = vmatprep.subr.mxu0 0.0
      %1522 = vmatpush1.msra.mxu0 0.0
      %1523 = vmatprep.subr.mxu0 0.0
      %1524 = vmatpush1.msra.mxu0 0.0
      %1525 = vmatprep.subr.mxu0 0.0
      %1526 = vmatpush1.msra.mxu0 %v1501
      %1527 = vmatprep.subr.mxu0 0.0
      %1528 = vmatpush1.msra.mxu0 %v1441
      %1529 = vmatprep.subr.mxu0 0.0
      %1530 = vmatpush1.msra.mxu0 %v1440
      %1531 = vmatprep.subr.mxu0 0.0
      %1532 = vmatpush1.msra.mxu0 %v1439
      %1533 = vmatprep.subr.mxu0 0.0
      %1534 = vmatpush1.msra.mxu0 %v1438
      %1535 = vmatprep.subr.mxu0 0.0
      %1536 = vmatpush2.msra.mxu0 0.0
      %1537 = vmatprep.subr.mxu0 0.0
      %1538 = vmatpush2.msra.mxu0 0.0
      %1539 = vmatprep.subr.mxu0 0.0
      %1540 = vmatpush2.msra.mxu0 0.0
      %1541 = vmatprep.subr.mxu0 0.0
      %1542 = vmatpush2.msra.mxu0 0.0
      %1543 = vmatprep.subr.mxu0 0.0
      %1544 = vmatpush2.msra.mxu0 0.0
      %1545 = vmatprep.subr.mxu0 0.0
      %1546 = vmatpush2.msra.mxu0 0.0
      %1547 = vmatprep.subr.mxu0 0.0
      %1548 = vmatpush2.msra.mxu0 0.0
      %1549 = vmatprep.subr.mxu0 0.0
      %1550 = vmatpush2.msra.mxu0 0.0
      %1551 = vmatprep.subr.mxu0 0.0
      %1552 = vmatpush2.msra.mxu0 0.0
      %1553 = vmatprep.subr.mxu0 0.0
      %1554 = vmatpush2.msra.mxu0 0.0
      %1555 = vmatprep.subr.mxu0 0.0
      %1556 = vmatpush2.msra.mxu0 0.0
      %1557 = vmatprep.subr.mxu0 0.0
      %1558 = vmatpush2.msra.mxu0 0.0
      %1559 = vmatprep.subr.mxu0 0.0
      %1560 = vmatpush2.msra.mxu0 0.0
      %1561 = vmatprep.subr.mxu0 0.0
      %1562 = vmatpush2.msra.mxu0 0.0
      %1563 = vmatprep.subr.mxu0 0.0
      %1564 = vmatpush2.msra.mxu0 0.0
      %1565 = vmatprep.subr.mxu0 0.0
      %1566 = vmatpush2.msra.mxu0 0.0
      %1567 = vmatprep.mubr.f32.mxu0 0.0
      %1568 = vmatmul.mubr.f32.gmra.mxu0 %v1452
      %v1569 = vpop.f32.mrf.mxu0
      %v1570 = vadd.f32 %v1448, %v1569
      %v1571 = vpop.f32.mrf.mxu0
      %1572 = vmatprep.mubr.f32.mxu0 0.0
      %1573 = vmatmul.mubr.f32.gmra.mxu0 %v1455
      %v1574 = vpop.f32.mrf.mxu0
      %v1575 = vadd.f32 %v1448, %v1574
      %v1576 = vpop.f32.mrf.mxu0
      %1577 = vmatprep.mubr.f32.mxu0 0.0
      %1578 = vmatmul.mubr.f32.gmra.mxu0 %v1458
      %v1579 = vpop.f32.mrf.mxu0
      %v1580 = vadd.f32 %v1448, %v1579
      %v1581 = vpop.f32.mrf.mxu0
      %1582 = vmatprep.mubr.f32.mxu0 0.0
      %1583 = vmatmul.mubr.f32.gmra.mxu0 %v1461
      %v1584 = vpop.f32.mrf.mxu0
      %v1585 = vadd.f32 %v1448, %v1584
      %v1586 = vpop.f32.mrf.mxu0
      %1587 = vmatprep.mubr.f32.mxu0 0.0
      %1588 = vmatmul.mubr.f32.gmra.mxu0 %v1464
      %v1589 = vpop.f32.mrf.mxu0
      %v1590 = vadd.f32 %v1448, %v1589
      %v1591 = vpop.f32.mrf.mxu0
      %1592 = vmatprep.mubr.f32.mxu0 0.0
      %1593 = vmatmul.mubr.f32.gmra.mxu0 %v1467
      %v1594 = vpop.f32.mrf.mxu0
      %v1595 = vadd.f32 %v1448, %v1594
      %v1596 = vpop.f32.mrf.mxu0
      %1597 = vmatprep.mubr.f32.mxu0 0.0
      %1598 = vmatmul.mubr.f32.gmra.mxu0 %v1470
      %v1599 = vpop.f32.mrf.mxu0
      %v1600 = vadd.f32 %v1448, %v1599
      %v1601 = vpop.f32.mrf.mxu0
      %1602 = vmatprep.mubr.f32.mxu0 0.0
      %1603 = vmatmul.mubr.f32.gmra.mxu0 %v1473
      %v1604 = vpop.f32.mrf.mxu0
      %v1605 = vadd.f32 %v1448, %v1604
      %v1606 = vpop.f32.mrf.mxu0
      %1607 = vmatprep.mubr.f32.mxu0 0.0
      %1608 = vmatmul.mubr.f32.gmra.mxu0 %v1476
      %v1609 = vpop.f32.mrf.mxu0
      %v1610 = vadd.f32 %v1448, %v1609
      %v1611 = vpop.f32.mrf.mxu0
      %1612 = vmatprep.mubr.f32.mxu0 0.0
      %1613 = vmatmul.mubr.f32.gmra.mxu0 %v1479
      %v1614 = vpop.f32.mrf.mxu0
      %v1615 = vadd.f32 %v1448, %v1614
      %v1616 = vpop.f32.mrf.mxu0
      %1617 = vmatprep.mubr.f32.mxu0 0.0
      %1618 = vmatmul.mubr.f32.gmra.mxu0 %v1482
      %v1619 = vpop.f32.mrf.mxu0
      %v1620 = vadd.f32 %v1448, %v1619
      %v1621 = vpop.f32.mrf.mxu0
      %1622 = vmatprep.mubr.f32.mxu0 0.0
      %1623 = vmatmul.mubr.f32.gmra.mxu0 %v1485
      %v1624 = vpop.f32.mrf.mxu0
      %v1625 = vadd.f32 %v1448, %v1624
      %v1626 = vpop.f32.mrf.mxu0
      %1627 = vmatprep.mubr.f32.mxu0 0.0
      %1628 = vmatmul.mubr.f32.gmra.mxu0 %v1488
      %v1629 = vpop.f32.mrf.mxu0
      %v1630 = vadd.f32 %v1448, %v1629
      %v1631 = vpop.f32.mrf.mxu0
      %1632 = vmatprep.mubr.f32.mxu0 0.0
      %1633 = vmatmul.mubr.f32.gmra.mxu0 %v1491
      %v1634 = vpop.f32.mrf.mxu0
      %v1635 = vadd.f32 %v1448, %v1634
      %v1636 = vpop.f32.mrf.mxu0
      %1637 = vmatprep.mubr.f32.mxu0 0.0
      %1638 = vmatmul.mubr.f32.gmra.mxu0 %v1494
      %v1639 = vpop.f32.mrf.mxu0
      %v1640 = vadd.f32 %v1448, %v1639
      %v1641 = vpop.f32.mrf.mxu0
      %1642 = vmatprep.mubr.f32.mxu0 0.0
      %1643 = vmatmul.mubr.f32.gmra.mxu0 %v1497
      %v1644 = vpop.f32.mrf.mxu0
      %v1645 = vadd.f32 %v1448, %v1644
      %v1646 = vpop.f32.mrf.mxu0
      %1647 = vdwg.mxu0
      %v1648 = vmax.f32 %v1570, 0.0
      %v1649 = vmax.f32 %v1575, 0.0
      %v1650 = vmax.f32 %v1580, 0.0
      %v1651 = vmax.f32 %v1585, 0.0
      %v1652 = vmax.f32 %v1590, 0.0
      %v1653 = vmax.f32 %v1595, 0.0
      %v1654 = vmax.f32 %v1600, 0.0
      %v1655 = vmax.f32 %v1605, 0.0
      %v1656 = vmax.f32 %v1610, 0.0
      %v1657 = vmax.f32 %v1615, 0.0
      %v1658 = vmax.f32 %v1620, 0.0
      %v1659 = vmax.f32 %v1625, 0.0
      %v1660 = vmax.f32 %v1630, 0.0
      %v1661 = vmax.f32 %v1635, 0.0
      %v1662 = vmax.f32 %v1640, 0.0
      %v1663 = vmax.f32 %v1645, 0.0
      %1664 = vst.msk [vmem:[%s335] sm:$0xff] %vm1319, %v1648
      %1665 = vst.msk [vmem:[%s335 + $0x8] sm:$0xff] %vm1319, %v1649
      %1666 = vst.msk [vmem:[%s335 + $0x20] sm:$0xff] %vm1319, %v1650
      %1667 = vst.msk [vmem:[%s335 + $0x28] sm:$0xff] %vm1319, %v1651
      %1668 = vst.msk [vmem:[%s335 + $0x40] sm:$0xff] %vm1319, %v1652
      %1669 = vst.msk [vmem:[%s335 + $0x48] sm:$0xff] %vm1319, %v1653
      %1670 = vst.msk [vmem:[%s335 + $0x60] sm:$0xff] %vm1319, %v1654
      %1671 = vst.msk [vmem:[%s335 + $0x68] sm:$0xff] %vm1319, %v1655
      %1672 = vst.msk [vmem:[%s335 + $0x80] sm:$0xff] %vm1319, %v1656
      %1673 = vst.msk [vmem:[%s335 + $0x88] sm:$0xff] %vm1319, %v1657
      %1674 = vst.msk [vmem:[%s335 + $0xa0] sm:$0xff] %vm1319, %v1658
      %1675 = vst.msk [vmem:[%s335 + $0xa8] sm:$0xff] %vm1319, %v1659
      %1676 = vst.msk [vmem:[%s335 + $0xc0] sm:$0xff] %vm1319, %v1660
      %1677 = vst.msk [vmem:[%s335 + $0xc8] sm:$0xff] %vm1319, %v1661
      %1678 = vst.msk [vmem:[%s335 + $0xe0] sm:$0xff] %vm1319, %v1662
      %1679 = vst.msk [vmem:[%s335 + $0xe8] sm:$0xff] %vm1319, %v1663
      %1696 = vrot.lane.b32.xlu0 %v1648, 120
      %v1697 = vpop.permute.xlu0 %1696
      %1698 = vrot.lane.b32.xlu0 %v1649, 120
      %v1699 = vpop.permute.xlu0 %1698
      %1700 = vrot.lane.b32.xlu0 %v1650, 120
      %v1701 = vpop.permute.xlu0 %1700
      %1702 = vrot.lane.b32.xlu0 %v1651, 120
      %v1703 = vpop.permute.xlu0 %1702
      %1704 = vrot.lane.b32.xlu0 %v1652, 120
      %v1705 = vpop.permute.xlu0 %1704
      %1706 = vrot.lane.b32.xlu0 %v1653, 120
      %v1707 = vpop.permute.xlu0 %1706
      %1708 = vrot.lane.b32.xlu0 %v1654, 120
      %v1709 = vpop.permute.xlu0 %1708
      %1710 = vrot.lane.b32.xlu0 %v1655, 120
      %v1711 = vpop.permute.xlu0 %1710
      %1712 = vrot.lane.b32.xlu0 %v1656, 120
      %v1713 = vpop.permute.xlu0 %1712
      %1714 = vrot.lane.b32.xlu0 %v1657, 120
      %v1715 = vpop.permute.xlu0 %1714
      %1716 = vrot.lane.b32.xlu0 %v1658, 120
      %v1717 = vpop.permute.xlu0 %1716
      %1718 = vrot.lane.b32.xlu0 %v1659, 120
      %v1719 = vpop.permute.xlu0 %1718
      %1720 = vrot.lane.b32.xlu0 %v1660, 120
      %v1721 = vpop.permute.xlu0 %1720
      %1722 = vrot.lane.b32.xlu0 %v1661, 120
      %v1723 = vpop.permute.xlu0 %1722
      %1724 = vrot.lane.b32.xlu0 %v1662, 120
      %v1725 = vpop.permute.xlu0 %1724
      %1726 = vrot.lane.b32.xlu0 %v1663, 120
      %v1727 = vpop.permute.xlu0 %1726
      %s1744 = scalar_lea.vmem %s335, 16
      %1745 = vst.msk [vmem:[%s1744] sm:$0xff] %vm1319, %v1697
      %1746 = vst.msk [vmem:[%s1744 + $0x8] sm:$0xff] %vm1319, %v1699
      %1747 = vst.msk [vmem:[%s1744 + $0x20] sm:$0xff] %vm1319, %v1701
      %1748 = vst.msk [vmem:[%s1744 + $0x28] sm:$0xff] %vm1319, %v1703
      %1749 = vst.msk [vmem:[%s1744 + $0x40] sm:$0xff] %vm1319, %v1705
      %1750 = vst.msk [vmem:[%s1744 + $0x48] sm:$0xff] %vm1319, %v1707
      %1751 = vst.msk [vmem:[%s1744 + $0x60] sm:$0xff] %vm1319, %v1709
      %1752 = vst.msk [vmem:[%s1744 + $0x68] sm:$0xff] %vm1319, %v1711
      %1753 = vst.msk [vmem:[%s1744 + $0x80] sm:$0xff] %vm1319, %v1713
      %1754 = vst.msk [vmem:[%s1744 + $0x88] sm:$0xff] %vm1319, %v1715
      %1755 = vst.msk [vmem:[%s1744 + $0xa0] sm:$0xff] %vm1319, %v1717
      %1756 = vst.msk [vmem:[%s1744 + $0xa8] sm:$0xff] %vm1319, %v1719
      %1757 = vst.msk [vmem:[%s1744 + $0xc0] sm:$0xff] %vm1319, %v1721
      %1758 = vst.msk [vmem:[%s1744 + $0xc8] sm:$0xff] %vm1319, %v1723
      %1759 = vst.msk [vmem:[%s1744 + $0xe0] sm:$0xff] %vm1319, %v1725
      %1760 = vst.msk [vmem:[%s1744 + $0xe8] sm:$0xff] %vm1319, %v1727
      %s1761 = smul.u32 8, %s21
      %p1762 = scmp.lt.s32.totalorder %s20, 1
      %s1763 = scalar_select %p1762, %s20, 1
      %p1764 = scmp.lt.s32.totalorder %s1761, 15
      %s1765 = scalar_select %p1764, %s1761, 15
      %s1766 = smul.addr %s1765, 4
      %s1767 = smul.addr %s1763, 64
      %s1768 = sadd.s32 %s1766, %s1767
      %s1769 = smul.addr %s1768, 8
      %s1770 = scalar_lea.vmem %s5, %s1769
      // Predicated region
      $region41: #{upsample_block_forward.1} parent=39 // pred_check
        %p1771 = pneg %p174
      $region42: #{upsample_block_forward.1} parent=39 // pred_check_branch
        %1773 = sbr.rel (%p1771) target = $region44
      $region43: #{upsample_block_forward.1} parent=39 // pred_region
        %s1774 = smul.u32 8, %s21
      $region44: #{upsample_block_forward.1} parent=39 // pred_fallthru
        _
    $region40: #{upsample_block_forward.1} parent=5 // pred_fallthru
      _
    %p1775 = scmp.le.s32.totalorder 2, %s11
    // Predicated region
    $region45: #{upsample_block_forward.1} parent=5 // pred_check
      %p1776 = pneg %p1775
    $region46: #{upsample_block_forward.1} parent=5 // pred_check_branch
      %1778 = sbr.rel (%p1776) target = $region48
    $region47: #{upsample_block_forward.1} parent=5 // pred_region
      %s1779 = ssub.s32 %s11, 2
      // Predicated region
      $region49: #{upsample_block_forward.1} parent=47 // pred_check
        %p1780 = pneg %p180
      $region50: #{upsample_block_forward.1} parent=47 // pred_check_branch
        %1782 = sbr.rel (%p1780) target = $region52
      $region51: #{upsample_block_forward.1} parent=47 // pred_region
        %s1783 = smul.u32 8, %s23
        %p1784 = scmp.lt.s32.totalorder %s22, 1
        %s1785 = scalar_select %p1784, %s22, 1
        %p1786 = scmp.lt.s32.totalorder %s1783, 15
        %s1787 = scalar_select %p1786, %s1783, 15
        %s1788 = smul.addr %s1787, 4
        %s1789 = smul.addr %s1785, 64
        %s1790 = sadd.s32 %s1788, %s1789
        %s1791 = smul.addr %s1790, 8
        %s1792 = scalar_lea.vmem %s5, %s1791
      $region52: #{upsample_block_forward.1} parent=47 // pred_fallthru
        _
    $region48: #{upsample_block_forward.1} parent=5 // pred_fallthru
      _
  $region6: #{upsample_block_forward.1} parent=0 // loop_footer
    %s15 = sadd.s32 1, %s11
  $region7: #{upsample_block_forward.1} parent=0 // loop_footer_branch
    %10 = sbr.rel target = $region3
  $region8: #{upsample_block_forward.1} parent=0 // loop_exit
    _

</llo_original>
